<compile_context>
chip_gen: v7x
topology: tpu7x:2x2x1
jax: 0.10.0
libtpu: 0.0.40
codegen_flags: <defaults>
</compile_context>

<pallas_src>
import functools
import math
from collections import namedtuple

import numpy as np
import jax
import jax.numpy as jnp
from jax.experimental import pallas as pl
from jax.experimental.pallas import tpu as pltpu


LayerMeta = namedtuple("LayerMeta", ["start", "pk", "kno", "i_dim"])


def _round_up(v, m):
    return ((v + m - 1) // m) * m


def build_layer_meta(index_dict):
    metas = []
    for idx in range(len(index_dict["layer"])):
        pk = index_dict["kernel_size"][idx] * index_dict["channels_in"][idx]
        metas.append(
            LayerMeta(
                start=int(index_dict["idx_start"][idx]),
                pk=int(pk),
                kno=int(index_dict["kernel_no"][idx]),
                i_dim=int(pk + 1),
            )
        )
    return metas


# ------------------------------ Pallas kernel --------------------------------
def _make_fused_kernel(metas, B, T, K_pad):
    """Build the kernel body with all layer metadata baked in as Python constants."""

    def kernel(x_ref, w_ref, bslab_ref, o_ref, xb_ref):
        # x_ref:     (B, D_total)       f32   flattened parameter vector
        # w_ref:     (L*K_pad, N_pad)   f32   per-layer Linear weights stacked along K
        # bslab_ref: (M_pad, N_pad)     f32   per-token Linear bias (0 on pad rows)
        # o_ref:     (M_pad, N_pad)     f32   output, rows already in token order
        # xb_ref:    (M_pad, L*K_pad)   f32   scratch: block-diagonal staged tokens
        xb_ref[...] = jnp.zeros_like(xb_ref)
        off = 0
        for l, m in enumerate(metas):
            c0 = l * K_pad                       # this layer's K-block start
            bstart = m.start + m.kno * m.pk      # first bias scalar of layer l in x
            for b in range(B):
                for k in range(m.kno):
                    row = b * T + off + k        # final token-order row index
                    s = m.start + k * m.pk
                    # contiguous weight slice -> columns [c0, c0+pk)
                    xb_ref[row : row + 1, c0 : c0 + m.pk] = (
                        x_ref[b : b + 1, s : s + m.pk]
                    )
                    # network bias scalar from x -> column c0 + pk
                    xb_ref[row : row + 1, c0 + m.pk : c0 + m.pk + 1] = (
                        x_ref[b : b + 1, bstart + k : bstart + k + 1]
                    )
            off += m.kno
        acc = jnp.dot(xb_ref[...], w_ref[...], preferred_element_type=jnp.float32)
        o_ref[...] = (acc + bslab_ref[...]).astype(o_ref.dtype)

    return kernel


# ------------------------------ Host-side glue --------------------------------
def pack_params(params, metas, *, B, K_pad, N_pad):
    """One-time parameter prep (no per-forward cost).

    Returns:
      w_big:     (L*K_pad, N_pad)  per-layer Linear weights stacked along K,
                 zero-padded (block-diagonal contraction against staged tokens).
      bias_slab: (M_pad, N_pad)    per-token Linear bias broadcast to its rows,
                 zero on padded rows / padded columns.
    """
    L = len(metas)
    T = sum(m.kno for m in metas)
    M_pad = _round_up(B * T, 8)
    K_big = L * K_pad

    w_big = np.zeros((K_big, N_pad), np.float32)
    bias_slab = np.zeros((M_pad, N_pad), np.float32)

    off = 0
    for l, (m, (W, b)) in enumerate(zip(metas, params)):
        W = np.asarray(W, np.float32)
        b = np.asarray(b, np.float32)
        d_model = W.shape[1]
        w_big[l * K_pad : l * K_pad + m.i_dim, :d_model] = W
        for bb in range(B):
            r0 = bb * T + off
            bias_slab[r0 : r0 + m.kno, :d_model] = b
        off += m.kno
    return jnp.asarray(w_big), jnp.asarray(bias_slab)


def embedder_neuron_group_index_forward(x, w_big, bias_slab, *, metas, d_model):
    """x: [B, D_total] -> y: [B, total_tokens, d_model] (single fused pallas_call)."""
    B = x.shape[0]
    T = sum(m.kno for m in metas)
    L = len(metas)
    M_pad, N_pad = bias_slab.shape
    K_big = w_big.shape[0]
    K_pad = K_big // L

    kernel = _make_fused_kernel(metas, B, T, K_pad)

    flops = int(2 * sum(B * m.kno * m.i_dim * d_model for m in metas))
    bytes_accessed = int(
        B * x.shape[1] * 4        # x (read whole into VMEM)
        + K_big * N_pad * 4       # stacked weights
        + M_pad * N_pad * 4       # bias slab
        + M_pad * N_pad * 4       # output slab
    )

    out = pl.pallas_call(
        kernel,
        out_shape=jax.ShapeDtypeStruct((M_pad, N_pad), jnp.float32),
        in_specs=[
            pl.BlockSpec(memory_space=pltpu.MemorySpace.VMEM),
            pl.BlockSpec(memory_space=pltpu.MemorySpace.VMEM),
            pl.BlockSpec(memory_space=pltpu.MemorySpace.VMEM),
        ],
        out_specs=pl.BlockSpec(memory_space=pltpu.MemorySpace.VMEM),
        scratch_shapes=[pltpu.VMEM((M_pad, K_big), jnp.float32)],
        cost_estimate=pl.CostEstimate(
            flops=flops, transcendentals=0, bytes_accessed=bytes_accessed
        ),
    )(x.astype(jnp.float32), w_big, bias_slab)

    # Rows are already in (batch-major, token-minor) order: one slice + reshape.
    return out[: B * T].reshape(B, T, N_pad)[:, :, :d_model]


# ------------------------------ Params / reference ----------------------------
def init_params(index_dict, d_model, seed=22):
    """Deterministic per-layer Linear(i_dim, d_model) params (PyTorch-style bound)."""
    key = jax.random.PRNGKey(seed)
    params = []
    for idx in range(len(index_dict["layer"])):
        i_dim = index_dict["kernel_size"][idx] * index_dict["channels_in"][idx] + 1
        key, kw, kb = jax.random.split(key, 3)
        bound = 1.0 / math.sqrt(i_dim)
        W = jax.random.uniform(kw, (i_dim, d_model), jnp.float32, -bound, bound)
        b = jax.random.uniform(kb, (d_model,), jnp.float32, -bound, bound)
        params.append((W, b))
    return params


def reference_forward_np(x, params, metas):
    """Pure-numpy float64 reference matching the PyTorch forward."""
    x = np.asarray(x, np.float64)
    B = x.shape[0]
    outs = []
    for (W, b), m in zip(params, metas):
        W = np.asarray(W, np.float64)
        b = np.asarray(b, np.float64)
        w_part = x[:, m.start : m.start + m.kno * m.pk].reshape(B, m.kno, m.pk)
        b_col = x[
            :, m.start + m.kno * m.pk : m.start + m.kno * m.pk + m.kno
        ].reshape(B, m.kno, 1)
        xl = np.concatenate([w_part, b_col], axis=-1)        # (B, kno, i_dim)
        outs.append(xl @ W + b)                               # (B, kno, d_model)
    return np.concatenate(outs, axis=1)                       # (B, T, d_model)


# ----------------------------------- main -------------------------------------
if __name__ == "__main__":
    # Small synthetic index_dict describing a tiny CNN whose flattened weights x embeds.
    index_dict = {
        "layer":       [0, 1, 2],
        "kernel_size": [9, 9, 16],
        "channels_in": [1, 4, 6],
        "kernel_no":   [4, 6, 5],
        "idx_start":   [0, 40, 262],
    }
    d_model = 32
    B = 2

    metas = build_layer_meta(index_dict)
    last = metas[-1]
    D_total = last.start + last.kno * last.pk + last.kno      # 747 flattened params

    params = init_params(index_dict, d_model, seed=22)

    K_pad = _round_up(max(m.i_dim for m in metas), 128)        # 128
    N_pad = _round_up(d_model, 128)                            # 128
    w_big, bias_slab = pack_params(params, metas, B=B, K_pad=K_pad, N_pad=N_pad)

    x = jax.random.normal(jax.random.PRNGKey(0), (B, D_total), dtype=jnp.float32)

    fwd = jax.jit(
        functools.partial(
            embedder_neuron_group_index_forward, metas=metas, d_model=d_model
        )
    )
    y = jax.block_until_ready(fwd(x, w_big, bias_slab))

    total_tokens = sum(index_dict["kernel_no"])
    assert y.shape == (B, total_tokens, d_model), y.shape

    # Check against a float64 numpy reference of the PyTorch forward.  Tolerance
    # accommodates the TPU MXU's reduced-precision f32 matmul passes.
    y_ref = reference_forward_np(np.asarray(x), params, metas)
    np.testing.assert_allclose(
        np.asarray(y), y_ref.astype(np.float32), rtol=2e-2, atol=2e-2
    )

    print("KERNEL_OK")
</pallas_src>

<mosaic_0001>
module attributes {stable_mosaic.version = 11 : i64} {
  func.func @kernel(%arg0: memref<2x747xf32, #tpu.memory_space<vmem>>, %arg1: memref<384x128xf32, #tpu.memory_space<vmem>>, %arg2: memref<32x128xf32, #tpu.memory_space<vmem>>, %arg3: memref<32x128xf32, #tpu.memory_space<vmem>>, %arg4: memref<32x384xf32, #tpu.memory_space<vmem>>) attributes {dimension_semantics = [], scalar_prefetch = 0 : i64, scratch_operands = 1 : i64, tpu.core_type = #tpu.core_type<tc>} {
    %cst = arith.constant 0.000000e+00 : f32
    %0 = vector.broadcast %cst : f32 to vector<32x384xf32>
    %c0 = arith.constant 0 : index
    %c0_0 = arith.constant 0 : index
    %1 = vector.load %arg4[%c0, %c0_0] : memref<32x384xf32, #tpu.memory_space<vmem>>, vector<32x384xf32>
    tpu.vector_store %arg4[%c0, %c0_0], %0 {strides = array<i32>} : memref<32x384xf32, #tpu.memory_space<vmem>>, vector<32x384xf32>,
    %c0_1 = arith.constant 0 : index
    %c0_2 = arith.constant 0 : index
    %2 = vector.load %arg0[%c0_1, %c0_2] : memref<2x747xf32, #tpu.memory_space<vmem>>, vector<1x9xf32>
    %c0_3 = arith.constant 0 : index
    %c0_4 = arith.constant 0 : index
    %3 = vector.load %arg4[%c0_3, %c0_4] : memref<32x384xf32, #tpu.memory_space<vmem>>, vector<1x9xf32>
    tpu.vector_store %arg4[%c0_3, %c0_4], %2 {strides = array<i32>} : memref<32x384xf32, #tpu.memory_space<vmem>>, vector<1x9xf32>,
    %c0_5 = arith.constant 0 : index
    %c36 = arith.constant 36 : index
    %4 = vector.load %arg0[%c0_5, %c36] : memref<2x747xf32, #tpu.memory_space<vmem>>, vector<1x1xf32>
    %c0_6 = arith.constant 0 : index
    %c9 = arith.constant 9 : index
    %5 = vector.load %arg4[%c0_6, %c9] : memref<32x384xf32, #tpu.memory_space<vmem>>, vector<1x1xf32>
    tpu.vector_store %arg4[%c0_6, %c9], %4 {strides = array<i32>} : memref<32x384xf32, #tpu.memory_space<vmem>>, vector<1x1xf32>,
    %c0_7 = arith.constant 0 : index
    %c9_8 = arith.constant 9 : index
    %6 = vector.load %arg0[%c0_7, %c9_8] : memref<2x747xf32, #tpu.memory_space<vmem>>, vector<1x9xf32>
    %c1 = arith.constant 1 : index
    %c0_9 = arith.constant 0 : index
    %7 = vector.load %arg4[%c1, %c0_9] : memref<32x384xf32, #tpu.memory_space<vmem>>, vector<1x9xf32>
    tpu.vector_store %arg4[%c1, %c0_9], %6 {strides = array<i32>} : memref<32x384xf32, #tpu.memory_space<vmem>>, vector<1x9xf32>,
    %c0_10 = arith.constant 0 : index
    %c37 = arith.constant 37 : index
    %8 = vector.load %arg0[%c0_10, %c37] : memref<2x747xf32, #tpu.memory_space<vmem>>, vector<1x1xf32>
    %c1_11 = arith.constant 1 : index
    %c9_12 = arith.constant 9 : index
    %9 = vector.load %arg4[%c1_11, %c9_12] : memref<32x384xf32, #tpu.memory_space<vmem>>, vector<1x1xf32>
    tpu.vector_store %arg4[%c1_11, %c9_12], %8 {strides = array<i32>} : memref<32x384xf32, #tpu.memory_space<vmem>>, vector<1x1xf32>,
    %c0_13 = arith.constant 0 : index
    %c18 = arith.constant 18 : index
    %10 = vector.load %arg0[%c0_13, %c18] : memref<2x747xf32, #tpu.memory_space<vmem>>, vector<1x9xf32>
    %c2 = arith.constant 2 : index
    %c0_14 = arith.constant 0 : index
    %11 = vector.load %arg4[%c2, %c0_14] : memref<32x384xf32, #tpu.memory_space<vmem>>, vector<1x9xf32>
    tpu.vector_store %arg4[%c2, %c0_14], %10 {strides = array<i32>} : memref<32x384xf32, #tpu.memory_space<vmem>>, vector<1x9xf32>,
    %c0_15 = arith.constant 0 : index
    %c38 = arith.constant 38 : index
    %12 = vector.load %arg0[%c0_15, %c38] : memref<2x747xf32, #tpu.memory_space<vmem>>, vector<1x1xf32>
    %c2_16 = arith.constant 2 : index
    %c9_17 = arith.constant 9 : index
    %13 = vector.load %arg4[%c2_16, %c9_17] : memref<32x384xf32, #tpu.memory_space<vmem>>, vector<1x1xf32>
    tpu.vector_store %arg4[%c2_16, %c9_17], %12 {strides = array<i32>} : memref<32x384xf32, #tpu.memory_space<vmem>>, vector<1x1xf32>,
    %c0_18 = arith.constant 0 : index
    %c27 = arith.constant 27 : index
    %14 = vector.load %arg0[%c0_18, %c27] : memref<2x747xf32, #tpu.memory_space<vmem>>, vector<1x9xf32>
    %c3 = arith.constant 3 : index
    %c0_19 = arith.constant 0 : index
    %15 = vector.load %arg4[%c3, %c0_19] : memref<32x384xf32, #tpu.memory_space<vmem>>, vector<1x9xf32>
    tpu.vector_store %arg4[%c3, %c0_19], %14 {strides = array<i32>} : memref<32x384xf32, #tpu.memory_space<vmem>>, vector<1x9xf32>,
    %c0_20 = arith.constant 0 : index
    %c39 = arith.constant 39 : index
    %16 = vector.load %arg0[%c0_20, %c39] : memref<2x747xf32, #tpu.memory_space<vmem>>, vector<1x1xf32>
    %c3_21 = arith.constant 3 : index
    %c9_22 = arith.constant 9 : index
    %17 = vector.load %arg4[%c3_21, %c9_22] : memref<32x384xf32, #tpu.memory_space<vmem>>, vector<1x1xf32>
    tpu.vector_store %arg4[%c3_21, %c9_22], %16 {strides = array<i32>} : memref<32x384xf32, #tpu.memory_space<vmem>>, vector<1x1xf32>,
    %c1_23 = arith.constant 1 : index
    %c0_24 = arith.constant 0 : index
    %18 = vector.load %arg0[%c1_23, %c0_24] : memref<2x747xf32, #tpu.memory_space<vmem>>, vector<1x9xf32>
    %c15 = arith.constant 15 : index
    %c0_25 = arith.constant 0 : index
    %19 = vector.load %arg4[%c15, %c0_25] : memref<32x384xf32, #tpu.memory_space<vmem>>, vector<1x9xf32>
    tpu.vector_store %arg4[%c15, %c0_25], %18 {strides = array<i32>} : memref<32x384xf32, #tpu.memory_space<vmem>>, vector<1x9xf32>,
    %c1_26 = arith.constant 1 : index
    %c36_27 = arith.constant 36 : index
    %20 = vector.load %arg0[%c1_26, %c36_27] : memref<2x747xf32, #tpu.memory_space<vmem>>, vector<1x1xf32>
    %c15_28 = arith.constant 15 : index
    %c9_29 = arith.constant 9 : index
    %21 = vector.load %arg4[%c15_28, %c9_29] : memref<32x384xf32, #tpu.memory_space<vmem>>, vector<1x1xf32>
    tpu.vector_store %arg4[%c15_28, %c9_29], %20 {strides = array<i32>} : memref<32x384xf32, #tpu.memory_space<vmem>>, vector<1x1xf32>,
    %c1_30 = arith.constant 1 : index
    %c9_31 = arith.constant 9 : index
    %22 = vector.load %arg0[%c1_30, %c9_31] : memref<2x747xf32, #tpu.memory_space<vmem>>, vector<1x9xf32>
    %c16 = arith.constant 16 : index
    %c0_32 = arith.constant 0 : index
    %23 = vector.load %arg4[%c16, %c0_32] : memref<32x384xf32, #tpu.memory_space<vmem>>, vector<1x9xf32>
    tpu.vector_store %arg4[%c16, %c0_32], %22 {strides = array<i32>} : memref<32x384xf32, #tpu.memory_space<vmem>>, vector<1x9xf32>,
    %c1_33 = arith.constant 1 : index
    %c37_34 = arith.constant 37 : index
    %24 = vector.load %arg0[%c1_33, %c37_34] : memref<2x747xf32, #tpu.memory_space<vmem>>, vector<1x1xf32>
    %c16_35 = arith.constant 16 : index
    %c9_36 = arith.constant 9 : index
    %25 = vector.load %arg4[%c16_35, %c9_36] : memref<32x384xf32, #tpu.memory_space<vmem>>, vector<1x1xf32>
    tpu.vector_store %arg4[%c16_35, %c9_36], %24 {strides = array<i32>} : memref<32x384xf32, #tpu.memory_space<vmem>>, vector<1x1xf32>,
    %c1_37 = arith.constant 1 : index
    %c18_38 = arith.constant 18 : index
    %26 = vector.load %arg0[%c1_37, %c18_38] : memref<2x747xf32, #tpu.memory_space<vmem>>, vector<1x9xf32>
    %c17 = arith.constant 17 : index
    %c0_39 = arith.constant 0 : index
    %27 = vector.load %arg4[%c17, %c0_39] : memref<32x384xf32, #tpu.memory_space<vmem>>, vector<1x9xf32>
    tpu.vector_store %arg4[%c17, %c0_39], %26 {strides = array<i32>} : memref<32x384xf32, #tpu.memory_space<vmem>>, vector<1x9xf32>,
    %c1_40 = arith.constant 1 : index
    %c38_41 = arith.constant 38 : index
    %28 = vector.load %arg0[%c1_40, %c38_41] : memref<2x747xf32, #tpu.memory_space<vmem>>, vector<1x1xf32>
    %c17_42 = arith.constant 17 : index
    %c9_43 = arith.constant 9 : index
    %29 = vector.load %arg4[%c17_42, %c9_43] : memref<32x384xf32, #tpu.memory_space<vmem>>, vector<1x1xf32>
    tpu.vector_store %arg4[%c17_42, %c9_43], %28 {strides = array<i32>} : memref<32x384xf32, #tpu.memory_space<vmem>>, vector<1x1xf32>,
    %c1_44 = arith.constant 1 : index
    %c27_45 = arith.constant 27 : index
    %30 = vector.load %arg0[%c1_44, %c27_45] : memref<2x747xf32, #tpu.memory_space<vmem>>, vector<1x9xf32>
    %c18_46 = arith.constant 18 : index
    %c0_47 = arith.constant 0 : index
    %31 = vector.load %arg4[%c18_46, %c0_47] : memref<32x384xf32, #tpu.memory_space<vmem>>, vector<1x9xf32>
    tpu.vector_store %arg4[%c18_46, %c0_47], %30 {strides = array<i32>} : memref<32x384xf32, #tpu.memory_space<vmem>>, vector<1x9xf32>,
    %c1_48 = arith.constant 1 : index
    %c39_49 = arith.constant 39 : index
    %32 = vector.load %arg0[%c1_48, %c39_49] : memref<2x747xf32, #tpu.memory_space<vmem>>, vector<1x1xf32>
    %c18_50 = arith.constant 18 : index
    %c9_51 = arith.constant 9 : index
    %33 = vector.load %arg4[%c18_50, %c9_51] : memref<32x384xf32, #tpu.memory_space<vmem>>, vector<1x1xf32>
    tpu.vector_store %arg4[%c18_50, %c9_51], %32 {strides = array<i32>} : memref<32x384xf32, #tpu.memory_space<vmem>>, vector<1x1xf32>,
    %c0_52 = arith.constant 0 : index
    %c40 = arith.constant 40 : index
    %34 = vector.load %arg0[%c0_52, %c40] : memref<2x747xf32, #tpu.memory_space<vmem>>, vector<1x36xf32>
    %c4 = arith.constant 4 : index
    %c128 = arith.constant 128 : index
    %35 = vector.load %arg4[%c4, %c128] : memref<32x384xf32, #tpu.memory_space<vmem>>, vector<1x36xf32>
    tpu.vector_store %arg4[%c4, %c128], %34 {strides = array<i32>} : memref<32x384xf32, #tpu.memory_space<vmem>>, vector<1x36xf32>,
    %c0_53 = arith.constant 0 : index
    %c256 = arith.constant 256 : index
    %36 = vector.load %arg0[%c0_53, %c256] : memref<2x747xf32, #tpu.memory_space<vmem>>, vector<1x1xf32>
    %c4_54 = arith.constant 4 : index
    %c164 = arith.constant 164 : index
    %37 = vector.load %arg4[%c4_54, %c164] : memref<32x384xf32, #tpu.memory_space<vmem>>, vector<1x1xf32>
    tpu.vector_store %arg4[%c4_54, %c164], %36 {strides = array<i32>} : memref<32x384xf32, #tpu.memory_space<vmem>>, vector<1x1xf32>,
    %c0_55 = arith.constant 0 : index
    %c76 = arith.constant 76 : index
    %38 = vector.load %arg0[%c0_55, %c76] : memref<2x747xf32, #tpu.memory_space<vmem>>, vector<1x36xf32>
    %c5 = arith.constant 5 : index
    %c128_56 = arith.constant 128 : index
    %39 = vector.load %arg4[%c5, %c128_56] : memref<32x384xf32, #tpu.memory_space<vmem>>, vector<1x36xf32>
    tpu.vector_store %arg4[%c5, %c128_56], %38 {strides = array<i32>} : memref<32x384xf32, #tpu.memory_space<vmem>>, vector<1x36xf32>,
    %c0_57 = arith.constant 0 : index
    %c257 = arith.constant 257 : index
    %40 = vector.load %arg0[%c0_57, %c257] : memref<2x747xf32, #tpu.memory_space<vmem>>, vector<1x1xf32>
    %c5_58 = arith.constant 5 : index
    %c164_59 = arith.constant 164 : index
    %41 = vector.load %arg4[%c5_58, %c164_59] : memref<32x384xf32, #tpu.memory_space<vmem>>, vector<1x1xf32>
    tpu.vector_store %arg4[%c5_58, %c164_59], %40 {strides = array<i32>} : memref<32x384xf32, #tpu.memory_space<vmem>>, vector<1x1xf32>,
    %c0_60 = arith.constant 0 : index
    %c112 = arith.constant 112 : index
    %42 = vector.load %arg0[%c0_60, %c112] : memref<2x747xf32, #tpu.memory_space<vmem>>, vector<1x36xf32>
    %c6 = arith.constant 6 : index
    %c128_61 = arith.constant 128 : index
    %43 = vector.load %arg4[%c6, %c128_61] : memref<32x384xf32, #tpu.memory_space<vmem>>, vector<1x36xf32>
    tpu.vector_store %arg4[%c6, %c128_61], %42 {strides = array<i32>} : memref<32x384xf32, #tpu.memory_space<vmem>>, vector<1x36xf32>,
    %c0_62 = arith.constant 0 : index
    %c258 = arith.constant 258 : index
    %44 = vector.load %arg0[%c0_62, %c258] : memref<2x747xf32, #tpu.memory_space<vmem>>, vector<1x1xf32>
    %c6_63 = arith.constant 6 : index
    %c164_64 = arith.constant 164 : index
    %45 = vector.load %arg4[%c6_63, %c164_64] : memref<32x384xf32, #tpu.memory_space<vmem>>, vector<1x1xf32>
    tpu.vector_store %arg4[%c6_63, %c164_64], %44 {strides = array<i32>} : memref<32x384xf32, #tpu.memory_space<vmem>>, vector<1x1xf32>,
    %c0_65 = arith.constant 0 : index
    %c148 = arith.constant 148 : index
    %46 = vector.load %arg0[%c0_65, %c148] : memref<2x747xf32, #tpu.memory_space<vmem>>, vector<1x36xf32>
    %c7 = arith.constant 7 : index
    %c128_66 = arith.constant 128 : index
    %47 = vector.load %arg4[%c7, %c128_66] : memref<32x384xf32, #tpu.memory_space<vmem>>, vector<1x36xf32>
    tpu.vector_store %arg4[%c7, %c128_66], %46 {strides = array<i32>} : memref<32x384xf32, #tpu.memory_space<vmem>>, vector<1x36xf32>,
    %c0_67 = arith.constant 0 : index
    %c259 = arith.constant 259 : index
    %48 = vector.load %arg0[%c0_67, %c259] : memref<2x747xf32, #tpu.memory_space<vmem>>, vector<1x1xf32>
    %c7_68 = arith.constant 7 : index
    %c164_69 = arith.constant 164 : index
    %49 = vector.load %arg4[%c7_68, %c164_69] : memref<32x384xf32, #tpu.memory_space<vmem>>, vector<1x1xf32>
    tpu.vector_store %arg4[%c7_68, %c164_69], %48 {strides = array<i32>} : memref<32x384xf32, #tpu.memory_space<vmem>>, vector<1x1xf32>,
    %c0_70 = arith.constant 0 : index
    %c184 = arith.constant 184 : index
    %50 = vector.load %arg0[%c0_70, %c184] : memref<2x747xf32, #tpu.memory_space<vmem>>, vector<1x36xf32>
    %c8 = arith.constant 8 : index
    %c128_71 = arith.constant 128 : index
    %51 = vector.load %arg4[%c8, %c128_71] : memref<32x384xf32, #tpu.memory_space<vmem>>, vector<1x36xf32>
    tpu.vector_store %arg4[%c8, %c128_71], %50 {strides = array<i32>} : memref<32x384xf32, #tpu.memory_space<vmem>>, vector<1x36xf32>,
    %c0_72 = arith.constant 0 : index
    %c260 = arith.constant 260 : index
    %52 = vector.load %arg0[%c0_72, %c260] : memref<2x747xf32, #tpu.memory_space<vmem>>, vector<1x1xf32>
    %c8_73 = arith.constant 8 : index
    %c164_74 = arith.constant 164 : index
    %53 = vector.load %arg4[%c8_73, %c164_74] : memref<32x384xf32, #tpu.memory_space<vmem>>, vector<1x1xf32>
    tpu.vector_store %arg4[%c8_73, %c164_74], %52 {strides = array<i32>} : memref<32x384xf32, #tpu.memory_space<vmem>>, vector<1x1xf32>,
    %c0_75 = arith.constant 0 : index
    %c220 = arith.constant 220 : index
    %54 = vector.load %arg0[%c0_75, %c220] : memref<2x747xf32, #tpu.memory_space<vmem>>, vector<1x36xf32>
    %c9_76 = arith.constant 9 : index
    %c128_77 = arith.constant 128 : index
    %55 = vector.load %arg4[%c9_76, %c128_77] : memref<32x384xf32, #tpu.memory_space<vmem>>, vector<1x36xf32>
    tpu.vector_store %arg4[%c9_76, %c128_77], %54 {strides = array<i32>} : memref<32x384xf32, #tpu.memory_space<vmem>>, vector<1x36xf32>,
    %c0_78 = arith.constant 0 : index
    %c261 = arith.constant 261 : index
    %56 = vector.load %arg0[%c0_78, %c261] : memref<2x747xf32, #tpu.memory_space<vmem>>, vector<1x1xf32>
    %c9_79 = arith.constant 9 : index
    %c164_80 = arith.constant 164 : index
    %57 = vector.load %arg4[%c9_79, %c164_80] : memref<32x384xf32, #tpu.memory_space<vmem>>, vector<1x1xf32>
    tpu.vector_store %arg4[%c9_79, %c164_80], %56 {strides = array<i32>} : memref<32x384xf32, #tpu.memory_space<vmem>>, vector<1x1xf32>,
    %c1_81 = arith.constant 1 : index
    %c40_82 = arith.constant 40 : index
    %58 = vector.load %arg0[%c1_81, %c40_82] : memref<2x747xf32, #tpu.memory_space<vmem>>, vector<1x36xf32>
    %c19 = arith.constant 19 : index
    %c128_83 = arith.constant 128 : index
    %59 = vector.load %arg4[%c19, %c128_83] : memref<32x384xf32, #tpu.memory_space<vmem>>, vector<1x36xf32>
    tpu.vector_store %arg4[%c19, %c128_83], %58 {strides = array<i32>} : memref<32x384xf32, #tpu.memory_space<vmem>>, vector<1x36xf32>,
    %c1_84 = arith.constant 1 : index
    %c256_85 = arith.constant 256 : index
    %60 = vector.load %arg0[%c1_84, %c256_85] : memref<2x747xf32, #tpu.memory_space<vmem>>, vector<1x1xf32>
    %c19_86 = arith.constant 19 : index
    %c164_87 = arith.constant 164 : index
    %61 = vector.load %arg4[%c19_86, %c164_87] : memref<32x384xf32, #tpu.memory_space<vmem>>, vector<1x1xf32>
    tpu.vector_store %arg4[%c19_86, %c164_87], %60 {strides = array<i32>} : memref<32x384xf32, #tpu.memory_space<vmem>>, vector<1x1xf32>,
    %c1_88 = arith.constant 1 : index
    %c76_89 = arith.constant 76 : index
    %62 = vector.load %arg0[%c1_88, %c76_89] : memref<2x747xf32, #tpu.memory_space<vmem>>, vector<1x36xf32>
    %c20 = arith.constant 20 : index
    %c128_90 = arith.constant 128 : index
    %63 = vector.load %arg4[%c20, %c128_90] : memref<32x384xf32, #tpu.memory_space<vmem>>, vector<1x36xf32>
    tpu.vector_store %arg4[%c20, %c128_90], %62 {strides = array<i32>} : memref<32x384xf32, #tpu.memory_space<vmem>>, vector<1x36xf32>,
    %c1_91 = arith.constant 1 : index
    %c257_92 = arith.constant 257 : index
    %64 = vector.load %arg0[%c1_91, %c257_92] : memref<2x747xf32, #tpu.memory_space<vmem>>, vector<1x1xf32>
    %c20_93 = arith.constant 20 : index
    %c164_94 = arith.constant 164 : index
    %65 = vector.load %arg4[%c20_93, %c164_94] : memref<32x384xf32, #tpu.memory_space<vmem>>, vector<1x1xf32>
    tpu.vector_store %arg4[%c20_93, %c164_94], %64 {strides = array<i32>} : memref<32x384xf32, #tpu.memory_space<vmem>>, vector<1x1xf32>,
    %c1_95 = arith.constant 1 : index
    %c112_96 = arith.constant 112 : index
    %66 = vector.load %arg0[%c1_95, %c112_96] : memref<2x747xf32, #tpu.memory_space<vmem>>, vector<1x36xf32>
    %c21 = arith.constant 21 : index
    %c128_97 = arith.constant 128 : index
    %67 = vector.load %arg4[%c21, %c128_97] : memref<32x384xf32, #tpu.memory_space<vmem>>, vector<1x36xf32>
    tpu.vector_store %arg4[%c21, %c128_97], %66 {strides = array<i32>} : memref<32x384xf32, #tpu.memory_space<vmem>>, vector<1x36xf32>,
    %c1_98 = arith.constant 1 : index
    %c258_99 = arith.constant 258 : index
    %68 = vector.load %arg0[%c1_98, %c258_99] : memref<2x747xf32, #tpu.memory_space<vmem>>, vector<1x1xf32>
    %c21_100 = arith.constant 21 : index
    %c164_101 = arith.constant 164 : index
    %69 = vector.load %arg4[%c21_100, %c164_101] : memref<32x384xf32, #tpu.memory_space<vmem>>, vector<1x1xf32>
    tpu.vector_store %arg4[%c21_100, %c164_101], %68 {strides = array<i32>} : memref<32x384xf32, #tpu.memory_space<vmem>>, vector<1x1xf32>,
    %c1_102 = arith.constant 1 : index
    %c148_103 = arith.constant 148 : index
    %70 = vector.load %arg0[%c1_102, %c148_103] : memref<2x747xf32, #tpu.memory_space<vmem>>, vector<1x36xf32>
    %c22 = arith.constant 22 : index
    %c128_104 = arith.constant 128 : index
    %71 = vector.load %arg4[%c22, %c128_104] : memref<32x384xf32, #tpu.memory_space<vmem>>, vector<1x36xf32>
    tpu.vector_store %arg4[%c22, %c128_104], %70 {strides = array<i32>} : memref<32x384xf32, #tpu.memory_space<vmem>>, vector<1x36xf32>,
    %c1_105 = arith.constant 1 : index
    %c259_106 = arith.constant 259 : index
    %72 = vector.load %arg0[%c1_105, %c259_106] : memref<2x747xf32, #tpu.memory_space<vmem>>, vector<1x1xf32>
    %c22_107 = arith.constant 22 : index
    %c164_108 = arith.constant 164 : index
    %73 = vector.load %arg4[%c22_107, %c164_108] : memref<32x384xf32, #tpu.memory_space<vmem>>, vector<1x1xf32>
    tpu.vector_store %arg4[%c22_107, %c164_108], %72 {strides = array<i32>} : memref<32x384xf32, #tpu.memory_space<vmem>>, vector<1x1xf32>,
    %c1_109 = arith.constant 1 : index
    %c184_110 = arith.constant 184 : index
    %74 = vector.load %arg0[%c1_109, %c184_110] : memref<2x747xf32, #tpu.memory_space<vmem>>, vector<1x36xf32>
    %c23 = arith.constant 23 : index
    %c128_111 = arith.constant 128 : index
    %75 = vector.load %arg4[%c23, %c128_111] : memref<32x384xf32, #tpu.memory_space<vmem>>, vector<1x36xf32>
    tpu.vector_store %arg4[%c23, %c128_111], %74 {strides = array<i32>} : memref<32x384xf32, #tpu.memory_space<vmem>>, vector<1x36xf32>,
    %c1_112 = arith.constant 1 : index
    %c260_113 = arith.constant 260 : index
    %76 = vector.load %arg0[%c1_112, %c260_113] : memref<2x747xf32, #tpu.memory_space<vmem>>, vector<1x1xf32>
    %c23_114 = arith.constant 23 : index
    %c164_115 = arith.constant 164 : index
    %77 = vector.load %arg4[%c23_114, %c164_115] : memref<32x384xf32, #tpu.memory_space<vmem>>, vector<1x1xf32>
    tpu.vector_store %arg4[%c23_114, %c164_115], %76 {strides = array<i32>} : memref<32x384xf32, #tpu.memory_space<vmem>>, vector<1x1xf32>,
    %c1_116 = arith.constant 1 : index
    %c220_117 = arith.constant 220 : index
    %78 = vector.load %arg0[%c1_116, %c220_117] : memref<2x747xf32, #tpu.memory_space<vmem>>, vector<1x36xf32>
    %c24 = arith.constant 24 : index
    %c128_118 = arith.constant 128 : index
    %79 = vector.load %arg4[%c24, %c128_118] : memref<32x384xf32, #tpu.memory_space<vmem>>, vector<1x36xf32>
    tpu.vector_store %arg4[%c24, %c128_118], %78 {strides = array<i32>} : memref<32x384xf32, #tpu.memory_space<vmem>>, vector<1x36xf32>,
    %c1_119 = arith.constant 1 : index
    %c261_120 = arith.constant 261 : index
    %80 = vector.load %arg0[%c1_119, %c261_120] : memref<2x747xf32, #tpu.memory_space<vmem>>, vector<1x1xf32>
    %c24_121 = arith.constant 24 : index
    %c164_122 = arith.constant 164 : index
    %81 = vector.load %arg4[%c24_121, %c164_122] : memref<32x384xf32, #tpu.memory_space<vmem>>, vector<1x1xf32>
    tpu.vector_store %arg4[%c24_121, %c164_122], %80 {strides = array<i32>} : memref<32x384xf32, #tpu.memory_space<vmem>>, vector<1x1xf32>,
    %c0_123 = arith.constant 0 : index
    %c262 = arith.constant 262 : index
    %82 = vector.load %arg0[%c0_123, %c262] : memref<2x747xf32, #tpu.memory_space<vmem>>, vector<1x96xf32>
    %c10 = arith.constant 10 : index
    %c256_124 = arith.constant 256 : index
    %83 = vector.load %arg4[%c10, %c256_124] : memref<32x384xf32, #tpu.memory_space<vmem>>, vector<1x96xf32>
    tpu.vector_store %arg4[%c10, %c256_124], %82 {strides = array<i32>} : memref<32x384xf32, #tpu.memory_space<vmem>>, vector<1x96xf32>,
    %c0_125 = arith.constant 0 : index
    %c742 = arith.constant 742 : index
    %84 = vector.load %arg0[%c0_125, %c742] : memref<2x747xf32, #tpu.memory_space<vmem>>, vector<1x1xf32>
    %c10_126 = arith.constant 10 : index
    %c352 = arith.constant 352 : index
    %85 = vector.load %arg4[%c10_126, %c352] : memref<32x384xf32, #tpu.memory_space<vmem>>, vector<1x1xf32>
    tpu.vector_store %arg4[%c10_126, %c352], %84 {strides = array<i32>} : memref<32x384xf32, #tpu.memory_space<vmem>>, vector<1x1xf32>,
    %c0_127 = arith.constant 0 : index
    %c358 = arith.constant 358 : index
    %86 = vector.load %arg0[%c0_127, %c358] : memref<2x747xf32, #tpu.memory_space<vmem>>, vector<1x96xf32>
    %c11 = arith.constant 11 : index
    %c256_128 = arith.constant 256 : index
    %87 = vector.load %arg4[%c11, %c256_128] : memref<32x384xf32, #tpu.memory_space<vmem>>, vector<1x96xf32>
    tpu.vector_store %arg4[%c11, %c256_128], %86 {strides = array<i32>} : memref<32x384xf32, #tpu.memory_space<vmem>>, vector<1x96xf32>,
    %c0_129 = arith.constant 0 : index
    %c743 = arith.constant 743 : index
    %88 = vector.load %arg0[%c0_129, %c743] : memref<2x747xf32, #tpu.memory_space<vmem>>, vector<1x1xf32>
    %c11_130 = arith.constant 11 : index
    %c352_131 = arith.constant 352 : index
    %89 = vector.load %arg4[%c11_130, %c352_131] : memref<32x384xf32, #tpu.memory_space<vmem>>, vector<1x1xf32>
    tpu.vector_store %arg4[%c11_130, %c352_131], %88 {strides = array<i32>} : memref<32x384xf32, #tpu.memory_space<vmem>>, vector<1x1xf32>,
    %c0_132 = arith.constant 0 : index
    %c454 = arith.constant 454 : index
    %90 = vector.load %arg0[%c0_132, %c454] : memref<2x747xf32, #tpu.memory_space<vmem>>, vector<1x96xf32>
    %c12 = arith.constant 12 : index
    %c256_133 = arith.constant 256 : index
    %91 = vector.load %arg4[%c12, %c256_133] : memref<32x384xf32, #tpu.memory_space<vmem>>, vector<1x96xf32>
    tpu.vector_store %arg4[%c12, %c256_133], %90 {strides = array<i32>} : memref<32x384xf32, #tpu.memory_space<vmem>>, vector<1x96xf32>,
    %c0_134 = arith.constant 0 : index
    %c744 = arith.constant 744 : index
    %92 = vector.load %arg0[%c0_134, %c744] : memref<2x747xf32, #tpu.memory_space<vmem>>, vector<1x1xf32>
    %c12_135 = arith.constant 12 : index
    %c352_136 = arith.constant 352 : index
    %93 = vector.load %arg4[%c12_135, %c352_136] : memref<32x384xf32, #tpu.memory_space<vmem>>, vector<1x1xf32>
    tpu.vector_store %arg4[%c12_135, %c352_136], %92 {strides = array<i32>} : memref<32x384xf32, #tpu.memory_space<vmem>>, vector<1x1xf32>,
    %c0_137 = arith.constant 0 : index
    %c550 = arith.constant 550 : index
    %94 = vector.load %arg0[%c0_137, %c550] : memref<2x747xf32, #tpu.memory_space<vmem>>, vector<1x96xf32>
    %c13 = arith.constant 13 : index
    %c256_138 = arith.constant 256 : index
    %95 = vector.load %arg4[%c13, %c256_138] : memref<32x384xf32, #tpu.memory_space<vmem>>, vector<1x96xf32>
    tpu.vector_store %arg4[%c13, %c256_138], %94 {strides = array<i32>} : memref<32x384xf32, #tpu.memory_space<vmem>>, vector<1x96xf32>,
    %c0_139 = arith.constant 0 : index
    %c745 = arith.constant 745 : index
    %96 = vector.load %arg0[%c0_139, %c745] : memref<2x747xf32, #tpu.memory_space<vmem>>, vector<1x1xf32>
    %c13_140 = arith.constant 13 : index
    %c352_141 = arith.constant 352 : index
    %97 = vector.load %arg4[%c13_140, %c352_141] : memref<32x384xf32, #tpu.memory_space<vmem>>, vector<1x1xf32>
    tpu.vector_store %arg4[%c13_140, %c352_141], %96 {strides = array<i32>} : memref<32x384xf32, #tpu.memory_space<vmem>>, vector<1x1xf32>,
    %c0_142 = arith.constant 0 : index
    %c646 = arith.constant 646 : index
    %98 = vector.load %arg0[%c0_142, %c646] : memref<2x747xf32, #tpu.memory_space<vmem>>, vector<1x96xf32>
    %c14 = arith.constant 14 : index
    %c256_143 = arith.constant 256 : index
    %99 = vector.load %arg4[%c14, %c256_143] : memref<32x384xf32, #tpu.memory_space<vmem>>, vector<1x96xf32>
    tpu.vector_store %arg4[%c14, %c256_143], %98 {strides = array<i32>} : memref<32x384xf32, #tpu.memory_space<vmem>>, vector<1x96xf32>,
    %c0_144 = arith.constant 0 : index
    %c746 = arith.constant 746 : index
    %100 = vector.load %arg0[%c0_144, %c746] : memref<2x747xf32, #tpu.memory_space<vmem>>, vector<1x1xf32>
    %c14_145 = arith.constant 14 : index
    %c352_146 = arith.constant 352 : index
    %101 = vector.load %arg4[%c14_145, %c352_146] : memref<32x384xf32, #tpu.memory_space<vmem>>, vector<1x1xf32>
    tpu.vector_store %arg4[%c14_145, %c352_146], %100 {strides = array<i32>} : memref<32x384xf32, #tpu.memory_space<vmem>>, vector<1x1xf32>,
    %c1_147 = arith.constant 1 : index
    %c262_148 = arith.constant 262 : index
    %102 = vector.load %arg0[%c1_147, %c262_148] : memref<2x747xf32, #tpu.memory_space<vmem>>, vector<1x96xf32>
    %c25 = arith.constant 25 : index
    %c256_149 = arith.constant 256 : index
    %103 = vector.load %arg4[%c25, %c256_149] : memref<32x384xf32, #tpu.memory_space<vmem>>, vector<1x96xf32>
    tpu.vector_store %arg4[%c25, %c256_149], %102 {strides = array<i32>} : memref<32x384xf32, #tpu.memory_space<vmem>>, vector<1x96xf32>,
    %c1_150 = arith.constant 1 : index
    %c742_151 = arith.constant 742 : index
    %104 = vector.load %arg0[%c1_150, %c742_151] : memref<2x747xf32, #tpu.memory_space<vmem>>, vector<1x1xf32>
    %c25_152 = arith.constant 25 : index
    %c352_153 = arith.constant 352 : index
    %105 = vector.load %arg4[%c25_152, %c352_153] : memref<32x384xf32, #tpu.memory_space<vmem>>, vector<1x1xf32>
    tpu.vector_store %arg4[%c25_152, %c352_153], %104 {strides = array<i32>} : memref<32x384xf32, #tpu.memory_space<vmem>>, vector<1x1xf32>,
    %c1_154 = arith.constant 1 : index
    %c358_155 = arith.constant 358 : index
    %106 = vector.load %arg0[%c1_154, %c358_155] : memref<2x747xf32, #tpu.memory_space<vmem>>, vector<1x96xf32>
    %c26 = arith.constant 26 : index
    %c256_156 = arith.constant 256 : index
    %107 = vector.load %arg4[%c26, %c256_156] : memref<32x384xf32, #tpu.memory_space<vmem>>, vector<1x96xf32>
    tpu.vector_store %arg4[%c26, %c256_156], %106 {strides = array<i32>} : memref<32x384xf32, #tpu.memory_space<vmem>>, vector<1x96xf32>,
    %c1_157 = arith.constant 1 : index
    %c743_158 = arith.constant 743 : index
    %108 = vector.load %arg0[%c1_157, %c743_158] : memref<2x747xf32, #tpu.memory_space<vmem>>, vector<1x1xf32>
    %c26_159 = arith.constant 26 : index
    %c352_160 = arith.constant 352 : index
    %109 = vector.load %arg4[%c26_159, %c352_160] : memref<32x384xf32, #tpu.memory_space<vmem>>, vector<1x1xf32>
    tpu.vector_store %arg4[%c26_159, %c352_160], %108 {strides = array<i32>} : memref<32x384xf32, #tpu.memory_space<vmem>>, vector<1x1xf32>,
    %c1_161 = arith.constant 1 : index
    %c454_162 = arith.constant 454 : index
    %110 = vector.load %arg0[%c1_161, %c454_162] : memref<2x747xf32, #tpu.memory_space<vmem>>, vector<1x96xf32>
    %c27_163 = arith.constant 27 : index
    %c256_164 = arith.constant 256 : index
    %111 = vector.load %arg4[%c27_163, %c256_164] : memref<32x384xf32, #tpu.memory_space<vmem>>, vector<1x96xf32>
    tpu.vector_store %arg4[%c27_163, %c256_164], %110 {strides = array<i32>} : memref<32x384xf32, #tpu.memory_space<vmem>>, vector<1x96xf32>,
    %c1_165 = arith.constant 1 : index
    %c744_166 = arith.constant 744 : index
    %112 = vector.load %arg0[%c1_165, %c744_166] : memref<2x747xf32, #tpu.memory_space<vmem>>, vector<1x1xf32>
    %c27_167 = arith.constant 27 : index
    %c352_168 = arith.constant 352 : index
    %113 = vector.load %arg4[%c27_167, %c352_168] : memref<32x384xf32, #tpu.memory_space<vmem>>, vector<1x1xf32>
    tpu.vector_store %arg4[%c27_167, %c352_168], %112 {strides = array<i32>} : memref<32x384xf32, #tpu.memory_space<vmem>>, vector<1x1xf32>,
    %c1_169 = arith.constant 1 : index
    %c550_170 = arith.constant 550 : index
    %114 = vector.load %arg0[%c1_169, %c550_170] : memref<2x747xf32, #tpu.memory_space<vmem>>, vector<1x96xf32>
    %c28 = arith.constant 28 : index
    %c256_171 = arith.constant 256 : index
    %115 = vector.load %arg4[%c28, %c256_171] : memref<32x384xf32, #tpu.memory_space<vmem>>, vector<1x96xf32>
    tpu.vector_store %arg4[%c28, %c256_171], %114 {strides = array<i32>} : memref<32x384xf32, #tpu.memory_space<vmem>>, vector<1x96xf32>,
    %c1_172 = arith.constant 1 : index
    %c745_173 = arith.constant 745 : index
    %116 = vector.load %arg0[%c1_172, %c745_173] : memref<2x747xf32, #tpu.memory_space<vmem>>, vector<1x1xf32>
    %c28_174 = arith.constant 28 : index
    %c352_175 = arith.constant 352 : index
    %117 = vector.load %arg4[%c28_174, %c352_175] : memref<32x384xf32, #tpu.memory_space<vmem>>, vector<1x1xf32>
    tpu.vector_store %arg4[%c28_174, %c352_175], %116 {strides = array<i32>} : memref<32x384xf32, #tpu.memory_space<vmem>>, vector<1x1xf32>,
    %c1_176 = arith.constant 1 : index
    %c646_177 = arith.constant 646 : index
    %118 = vector.load %arg0[%c1_176, %c646_177] : memref<2x747xf32, #tpu.memory_space<vmem>>, vector<1x96xf32>
    %c29 = arith.constant 29 : index
    %c256_178 = arith.constant 256 : index
    %119 = vector.load %arg4[%c29, %c256_178] : memref<32x384xf32, #tpu.memory_space<vmem>>, vector<1x96xf32>
    tpu.vector_store %arg4[%c29, %c256_178], %118 {strides = array<i32>} : memref<32x384xf32, #tpu.memory_space<vmem>>, vector<1x96xf32>,
    %c1_179 = arith.constant 1 : index
    %c746_180 = arith.constant 746 : index
    %120 = vector.load %arg0[%c1_179, %c746_180] : memref<2x747xf32, #tpu.memory_space<vmem>>, vector<1x1xf32>
    %c29_181 = arith.constant 29 : index
    %c352_182 = arith.constant 352 : index
    %121 = vector.load %arg4[%c29_181, %c352_182] : memref<32x384xf32, #tpu.memory_space<vmem>>, vector<1x1xf32>
    tpu.vector_store %arg4[%c29_181, %c352_182], %120 {strides = array<i32>} : memref<32x384xf32, #tpu.memory_space<vmem>>, vector<1x1xf32>,
    %c0_183 = arith.constant 0 : index
    %c0_184 = arith.constant 0 : index
    %122 = vector.load %arg4[%c0_183, %c0_184] : memref<32x384xf32, #tpu.memory_space<vmem>>, vector<32x384xf32>
    %c0_185 = arith.constant 0 : index
    %c0_186 = arith.constant 0 : index
    %123 = vector.load %arg1[%c0_185, %c0_186] : memref<384x128xf32, #tpu.memory_space<vmem>>, vector<384x128xf32>
    %cst_187 = arith.constant dense<0.000000e+00> : vector<32x128xf32>
    %124 = tpu.matmul %122, %123, %cst_187 {dimension_numbers = #tpu.dot_dimension_numbers<[1], [0], [0], [1], [0, 0, 1, 1], [], []>} : vector<32x384xf32>, vector<384x128xf32>, vector<32x128xf32> -> vector<32x128xf32>
    %c0_188 = arith.constant 0 : index
    %c0_189 = arith.constant 0 : index
    %125 = vector.load %arg2[%c0_188, %c0_189] : memref<32x128xf32, #tpu.memory_space<vmem>>, vector<32x128xf32>
    %126 = arith.addf %124, %125 : vector<32x128xf32>
    %c0_190 = arith.constant 0 : index
    %c0_191 = arith.constant 0 : index
    %127 = vector.load %arg3[%c0_190, %c0_191] : memref<32x128xf32, #tpu.memory_space<vmem>>, vector<32x128xf32>
    tpu.vector_store %arg3[%c0_190, %c0_191], %126 {strides = array<i32>} : memref<32x128xf32, #tpu.memory_space<vmem>>, vector<32x128xf32>,
    return
  }
}

</mosaic_0001>

<llo_original>
// kernel: embedder_neuron_group_index_forward.1
$region0: #{embedder_neuron_group_index_forward.1}
  #allocation0 [shape = 'u32[]', space=smem, size = 0x4, offset = 0x4, fixed_abs, tag = 'smem constant byte address 0x4 - core index']
  #allocation1 [shape = 'u32[144,128]{1,0:T(1,128)}', space=vmem, size = 0x12000, scoped, tag = 'internal scratch']
  #allocation2 [shape = 'f32[32,384]{1,0:T(8,128)}', space=vmem, size = 0xc000, scoped, tag = 'scratch operand']
  %s0 = inlined_call_operand.hbm [shape: f32[2,747], index: 0, kind: input, shape index: {}]
  %s1 = inlined_call_operand.hbm [shape: f32[384,128], index: 1, kind: input, shape index: {}]
  %s2 = inlined_call_operand.hbm [shape: f32[32,128], index: 2, kind: input, shape index: {}]
  %s3 = inlined_call_operand.vmem [shape: f32[32,128], index: 3, kind: output, shape index: {}]
  %s4 = sld [smem:[#allocation0]]
  $region34: #{embedder_neuron_group_index_forward.1} parent=0
    _
  %s6 = ssub.s32 1, %s4
  %s7 = scalar_select 0, %s6, %s4
  $region1: #{embedder_neuron_group_index_forward.1} parent=0
    #allocation3 [shape = 'u8[6144]{0}', space=vmem, size = 0x1800, scoped, tag = 'input window, operand 0, single buffered']
    #allocation4 [shape = 's32[1]{0}', space=sflag, size = 0x4, scoped, tag = 'scoped memory for embedder_neuron_group_index_forward.1']
    #allocation5 [shape = 'u8[196608]{0}', space=vmem, size = 0x30000, scoped, tag = 'input window, operand 1, single buffered']
    #allocation6 [shape = 's32[1]{0}', space=sflag, size = 0x4, scoped, tag = 'scoped memory for embedder_neuron_group_index_forward.1']
    #allocation7 [shape = 'u8[16384]{0}', space=vmem, size = 0x4000, scoped, tag = 'input window, operand 2, single buffered']
    %8 = vsyncpa [#allocation4], 0
    %9 = vsyncpa [#allocation6], 0
    // Predicated region
    $region2: #{embedder_neuron_group_index_forward.1} parent=1 // pred_check
      _
    $region3: #{embedder_neuron_group_index_forward.1} parent=1 // pred_check_branch
      %11 = sbr.rel (0) target = $region5
    $region4: #{embedder_neuron_group_index_forward.1} parent=1 // pred_region
      %s13 = ssub.s32 192, 192
      %14 = vsyncadd [#allocation4], %s13
      %s16 = sshll.u32 [#allocation3], 4
      %s17 = int_to_ptr.vmem [resolvable:$true] %s16
      %19 = dma.hbm_to_vmem [thread:$0]  %s0, 192, %s17, [#allocation4]
    $region5: #{embedder_neuron_group_index_forward.1} parent=1 // pred_fallthru
      _
    // Predicated region
    $region6: #{embedder_neuron_group_index_forward.1} parent=1 // pred_check
      _
    $region7: #{embedder_neuron_group_index_forward.1} parent=1 // pred_check_branch
      %21 = sbr.rel (0) target = $region9
    $region8: #{embedder_neuron_group_index_forward.1} parent=1 // pred_region
      %s23 = ssub.s32 6144, 6144
      %24 = vsyncadd [#allocation6], %s23
      %s25 = sshll.u32 [#allocation5], 4
      %s26 = int_to_ptr.vmem [resolvable:$true] %s25
      %31 = dma.hbm_to_vmem [thread:$0]  %s1, 6144, %s26, [#allocation6], 128, 128, 8
    $region9: #{embedder_neuron_group_index_forward.1} parent=1 // pred_fallthru
      _
    // Predicated region
    $region10: #{embedder_neuron_group_index_forward.1} parent=1 // pred_check
      _
    $region11: #{embedder_neuron_group_index_forward.1} parent=1 // pred_check_branch
      %33 = sbr.rel (0) target = $region13
    $region12: #{embedder_neuron_group_index_forward.1} parent=1 // pred_region
      %s35 = ssub.s32 512, 512
      %36 = vsyncadd [#allocation6], %s35
      %s37 = sshll.u32 [#allocation7], 4
      %s38 = int_to_ptr.vmem [resolvable:$true] %s37
      %43 = dma.hbm_to_vmem [thread:$0]  %s2, 512, %s38, [#allocation6], 128, 128, 8
    $region13: #{embedder_neuron_group_index_forward.1} parent=1 // pred_fallthru
      _
    // Predicated region
    $region14: #{embedder_neuron_group_index_forward.1} parent=1 // pred_check
      _
    $region15: #{embedder_neuron_group_index_forward.1} parent=1 // pred_check_branch
      %45 = sbr.rel (0) target = $region17
    $region16: #{embedder_neuron_group_index_forward.1} parent=1 // pred_region
      %46 = dma.done [#allocation4], 192
    $region17: #{embedder_neuron_group_index_forward.1} parent=1 // pred_fallthru
      _
    // Predicated region
    $region18: #{embedder_neuron_group_index_forward.1} parent=1 // pred_check
      _
    $region19: #{embedder_neuron_group_index_forward.1} parent=1 // pred_check_branch
      %48 = sbr.rel (0) target = $region21
    $region20: #{embedder_neuron_group_index_forward.1} parent=1 // pred_region
      %49 = dma.done [#allocation6], 6144
    $region21: #{embedder_neuron_group_index_forward.1} parent=1 // pred_fallthru
      _
    // Predicated region
    $region22: #{embedder_neuron_group_index_forward.1} parent=1 // pred_check
      _
    $region23: #{embedder_neuron_group_index_forward.1} parent=1 // pred_check_branch
      %51 = sbr.rel (0) target = $region25
    $region24: #{embedder_neuron_group_index_forward.1} parent=1 // pred_region
      %52 = dma.done [#allocation6], 512
    $region25: #{embedder_neuron_group_index_forward.1} parent=1 // pred_fallthru
      _
    %53 = vst [vmem:[#allocation2] sm:$0xff] 0.0
    %54 = vst [vmem:[#allocation2 + $0x8] sm:$0xff] 0.0
    %55 = vst [vmem:[#allocation2 + $0x10] sm:$0xff] 0.0
    %56 = vst [vmem:[#allocation2 + $0x18] sm:$0xff] 0.0
    %57 = vst [vmem:[#allocation2 + $0x20] sm:$0xff] 0.0
    %58 = vst [vmem:[#allocation2 + $0x28] sm:$0xff] 0.0
    %59 = vst [vmem:[#allocation2 + $0x30] sm:$0xff] 0.0
    %60 = vst [vmem:[#allocation2 + $0x38] sm:$0xff] 0.0
    %61 = vst [vmem:[#allocation2 + $0x40] sm:$0xff] 0.0
    %62 = vst [vmem:[#allocation2 + $0x48] sm:$0xff] 0.0
    %63 = vst [vmem:[#allocation2 + $0x50] sm:$0xff] 0.0
    %64 = vst [vmem:[#allocation2 + $0x58] sm:$0xff] 0.0
    %v65 = vld [vmem:[#allocation3] sm:$0x1]
    %vm66 = vcmask 65536
    %67 = vst.msk [vmem:[#allocation2] sm:$0x1] %vm66, %v65
    %v68 = vld [vmem:[#allocation3] sm:$0x1]
    %v70 = vlaneseq
    %v71 = vshrl.u32 %v70, 7
    %v72 = vsub.s32 0, %v71
    %v73 = vrot.slane %v68, %v72
    %74 = vrot.lane.b32.xlu0 %v73, 101
    %v75 = vpop.permute.xlu0 %74
    %vm77 = vcmask 73800
    %78 = vst.msk [vmem:[#allocation2] sm:$0x1] %vm77, %v75
    %v79 = vld [vmem:[#allocation3] sm:$0x1]
    %v81 = vlaneseq
    %v82 = vshrl.u32 %v81, 7
    %v83 = vsub.s32 0, %v82
    %v84 = vrot.slane %v79, %v83
    %85 = vrot.lane.b32.xlu0 %v84, 119
    %v86 = vpop.permute.xlu0 %85
    %88 = vst.msk [vmem:[#allocation2 + $0x1] sm:$0x1] %vm66, %v86
    %v89 = vld [vmem:[#allocation3] sm:$0x1]
    %v91 = vlaneseq
    %v92 = vshrl.u32 %v91, 7
    %v93 = vsub.s32 0, %v92
    %v94 = vrot.slane %v89, %v93
    %95 = vrot.lane.b32.xlu0 %v94, 100
    %v96 = vpop.permute.xlu0 %95
    %98 = vst.msk [vmem:[#allocation2 + $0x1] sm:$0x1] %vm77, %v96
    %v99 = vld [vmem:[#allocation3] sm:$0x1]
    %v101 = vlaneseq
    %v102 = vshrl.u32 %v101, 7
    %v103 = vsub.s32 0, %v102
    %v104 = vrot.slane %v99, %v103
    %105 = vrot.lane.b32.xlu0 %v104, 110
    %v106 = vpop.permute.xlu0 %105
    %108 = vst.msk [vmem:[#allocation2 + $0x2] sm:$0x1] %vm66, %v106
    %v109 = vld [vmem:[#allocation3] sm:$0x1]
    %v111 = vlaneseq
    %v112 = vshrl.u32 %v111, 7
    %v113 = vsub.s32 0, %v112
    %v114 = vrot.slane %v109, %v113
    %115 = vrot.lane.b32.xlu0 %v114, 99
    %v116 = vpop.permute.xlu0 %115
    %118 = vst.msk [vmem:[#allocation2 + $0x2] sm:$0x1] %vm77, %v116
    %v119 = vld [vmem:[#allocation3] sm:$0x1]
    %v121 = vlaneseq
    %v122 = vshrl.u32 %v121, 7
    %v123 = vsub.s32 0, %v122
    %v124 = vrot.slane %v119, %v123
    %125 = vrot.lane.b32.xlu0 %v124, 101
    %v126 = vpop.permute.xlu0 %125
    %128 = vst.msk [vmem:[#allocation2 + $0x3] sm:$0x1] %vm66, %v126
    %v129 = vld [vmem:[#allocation3] sm:$0x1]
    %v131 = vlaneseq
    %v132 = vshrl.u32 %v131, 7
    %v133 = vsub.s32 0, %v132
    %v134 = vrot.slane %v129, %v133
    %135 = vrot.lane.b32.xlu0 %v134, 98
    %v136 = vpop.permute.xlu0 %135
    %138 = vst.msk [vmem:[#allocation2 + $0x3] sm:$0x1] %vm77, %v136
    %v139 = vld [vmem:[#allocation3 + $0x1] sm:$0x1]
    %140 = vst.msk [vmem:[#allocation2 + $0x1f] sm:$0x1] %vm66, %v139
    %v141 = vld [vmem:[#allocation3 + $0x1] sm:$0x1]
    %v143 = vlaneseq
    %v144 = vshrl.u32 %v143, 7
    %v145 = vsub.s32 0, %v144
    %v146 = vrot.slane %v141, %v145
    %147 = vrot.lane.b32.xlu0 %v146, 101
    %v148 = vpop.permute.xlu0 %147
    %150 = vst.msk [vmem:[#allocation2 + $0x1f] sm:$0x1] %vm77, %v148
    %v151 = vld [vmem:[#allocation3 + $0x1] sm:$0x1]
    %v153 = vlaneseq
    %v154 = vshrl.u32 %v153, 7
    %v155 = vsub.s32 0, %v154
    %v156 = vrot.slane %v151, %v155
    %157 = vrot.lane.b32.xlu0 %v156, 119
    %v158 = vpop.permute.xlu0 %157
    %160 = vst.msk [vmem:[#allocation2 + $0x30] sm:$0x1] %vm66, %v158
    %v161 = vld [vmem:[#allocation3 + $0x1] sm:$0x1]
    %v163 = vlaneseq
    %v164 = vshrl.u32 %v163, 7
    %v165 = vsub.s32 0, %v164
    %v166 = vrot.slane %v161, %v165
    %167 = vrot.lane.b32.xlu0 %v166, 100
    %v168 = vpop.permute.xlu0 %167
    %170 = vst.msk [vmem:[#allocation2 + $0x30] sm:$0x1] %vm77, %v168
    %v171 = vld [vmem:[#allocation3 + $0x1] sm:$0x1]
    %v173 = vlaneseq
    %v174 = vshrl.u32 %v173, 7
    %v175 = vsub.s32 0, %v174
    %v176 = vrot.slane %v171, %v175
    %177 = vrot.lane.b32.xlu0 %v176, 110
    %v178 = vpop.permute.xlu0 %177
    %180 = vst.msk [vmem:[#allocation2 + $0x31] sm:$0x1] %vm66, %v178
    %v181 = vld [vmem:[#allocation3 + $0x1] sm:$0x1]
    %v183 = vlaneseq
    %v184 = vshrl.u32 %v183, 7
    %v185 = vsub.s32 0, %v184
    %v186 = vrot.slane %v181, %v185
    %187 = vrot.lane.b32.xlu0 %v186, 99
    %v188 = vpop.permute.xlu0 %187
    %190 = vst.msk [vmem:[#allocation2 + $0x31] sm:$0x1] %vm77, %v188
    %v191 = vld [vmem:[#allocation3 + $0x1] sm:$0x1]
    %v193 = vlaneseq
    %v194 = vshrl.u32 %v193, 7
    %v195 = vsub.s32 0, %v194
    %v196 = vrot.slane %v191, %v195
    %197 = vrot.lane.b32.xlu0 %v196, 101
    %v198 = vpop.permute.xlu0 %197
    %200 = vst.msk [vmem:[#allocation2 + $0x32] sm:$0x1] %vm66, %v198
    %v201 = vld [vmem:[#allocation3 + $0x1] sm:$0x1]
    %v203 = vlaneseq
    %v204 = vshrl.u32 %v203, 7
    %v205 = vsub.s32 0, %v204
    %v206 = vrot.slane %v201, %v205
    %207 = vrot.lane.b32.xlu0 %v206, 98
    %v208 = vpop.permute.xlu0 %207
    %210 = vst.msk [vmem:[#allocation2 + $0x32] sm:$0x1] %vm77, %v208
    %v211 = vld [vmem:[#allocation3] sm:$0x1]
    %v213 = vlaneseq
    %v214 = vshrl.u32 %v213, 7
    %v215 = vsub.s32 0, %v214
    %v216 = vrot.slane %v211, %v215
    %217 = vrot.lane.b32.xlu0 %v216, 88
    %v218 = vpop.permute.xlu0 %217
    %vm220 = vcmask 286720
    %221 = vst.msk [vmem:[#allocation2 + $0xc] sm:$0x1] %vm220, %v218
    %v222 = vld [vmem:[#allocation3 + $0x4] sm:$0x1]
    %v224 = vlaneseq
    %v225 = vshrl.u32 %v224, 7
    %v226 = vsub.s32 0, %v225
    %v227 = vrot.slane %v222, %v226
    %228 = vrot.lane.b32.xlu0 %v227, 36
    %v229 = vpop.permute.xlu0 %228
    %vm231 = vcmask 295200
    %232 = vst.msk [vmem:[#allocation2 + $0xc] sm:$0x1] %vm231, %v229
    %v233 = vld [vmem:[#allocation3] sm:$0x1]
    %v235 = vlaneseq
    %v236 = vshrl.u32 %v235, 7
    %v237 = vsub.s32 0, %v236
    %v238 = vrot.slane %v233, %v237
    %239 = vrot.lane.b32.xlu0 %v238, 52
    %v240 = vpop.permute.xlu0 %239
    %242 = vst.msk [vmem:[#allocation2 + $0xd] sm:$0x1] %vm220, %v240
    %v243 = vld [vmem:[#allocation3 + $0x4] sm:$0x1]
    %v245 = vlaneseq
    %v246 = vshrl.u32 %v245, 7
    %v247 = vsub.s32 0, %v246
    %v248 = vrot.slane %v243, %v247
    %249 = vrot.lane.b32.xlu0 %v248, 35
    %v250 = vpop.permute.xlu0 %249
    %252 = vst.msk [vmem:[#allocation2 + $0xd] sm:$0x1] %vm231, %v250
    %v253 = vld [vmem:[#allocation3] sm:$0x5]
    %v255 = vlaneseq
    %v256 = vshrl.u32 %v255, 7
    %v257 = vsub.s32 0, %v256
    %v258 = vrot.slane %v253, %v257
    %v259 = vlaneseq
    %v260 = vshrl.u32 %v259, 7
    %v261 = vsub.s32 2, %v260
    %v262 = vrot.slane %v253, %v261
    %263 = vrot.lane.b32.xlu0 %v258, 16
    %v264 = vpop.permute.xlu0 %263
    %265 = vrot.lane.b32.xlu0 %v262, 16
    %v266 = vpop.permute.xlu0 %265
    %vm267 = vcmask 130048
    %v268 = vsel %vm267, %v264, %v266
    %270 = vst.msk [vmem:[#allocation2 + $0xe] sm:$0x1] %vm220, %v268
    %v271 = vld [vmem:[#allocation3 + $0x4] sm:$0x1]
    %v273 = vlaneseq
    %v274 = vshrl.u32 %v273, 7
    %v275 = vsub.s32 0, %v274
    %v276 = vrot.slane %v271, %v275
    %277 = vrot.lane.b32.xlu0 %v276, 34
    %v278 = vpop.permute.xlu0 %277
    %280 = vst.msk [vmem:[#allocation2 + $0xe] sm:$0x1] %vm231, %v278
    %v281 = vld [vmem:[#allocation3 + $0x2] sm:$0x1]
    %v283 = vlaneseq
    %v284 = vshrl.u32 %v283, 7
    %v285 = vsub.s32 0, %v284
    %v286 = vrot.slane %v281, %v285
    %287 = vrot.lane.b32.xlu0 %v286, 108
    %v288 = vpop.permute.xlu0 %287
    %290 = vst.msk [vmem:[#allocation2 + $0xf] sm:$0x1] %vm220, %v288
    %v291 = vld [vmem:[#allocation3 + $0x4] sm:$0x1]
    %v293 = vlaneseq
    %v294 = vshrl.u32 %v293, 7
    %v295 = vsub.s32 0, %v294
    %v296 = vrot.slane %v291, %v295
    %297 = vrot.lane.b32.xlu0 %v296, 33
    %v298 = vpop.permute.xlu0 %297
    %300 = vst.msk [vmem:[#allocation2 + $0xf] sm:$0x1] %vm231, %v298
    %v301 = vld [vmem:[#allocation3 + $0x2] sm:$0x1]
    %v303 = vlaneseq
    %v304 = vshrl.u32 %v303, 7
    %v305 = vsub.s32 0, %v304
    %v306 = vrot.slane %v301, %v305
    %307 = vrot.lane.b32.xlu0 %v306, 72
    %v308 = vpop.permute.xlu0 %307
    %310 = vst.msk [vmem:[#allocation2 + $0x20] sm:$0x1] %vm220, %v308
    %v311 = vld [vmem:[#allocation3 + $0x4] sm:$0x1]
    %v313 = vlaneseq
    %v314 = vshrl.u32 %v313, 7
    %v315 = vsub.s32 0, %v314
    %v316 = vrot.slane %v311, %v315
    %317 = vrot.lane.b32.xlu0 %v316, 32
    %v318 = vpop.permute.xlu0 %317
    %320 = vst.msk [vmem:[#allocation2 + $0x20] sm:$0x1] %vm231, %v318
    %v321 = vld [vmem:[#allocation3 + $0x2] sm:$0x1]
    %v323 = vlaneseq
    %v324 = vshrl.u32 %v323, 7
    %v325 = vsub.s32 0, %v324
    %v326 = vrot.slane %v321, %v325
    %327 = vrot.lane.b32.xlu0 %v326, 36
    %v328 = vpop.permute.xlu0 %327
    %330 = vst.msk [vmem:[#allocation2 + $0x21] sm:$0x1] %vm220, %v328
    %v331 = vld [vmem:[#allocation3 + $0x4] sm:$0x1]
    %v333 = vlaneseq
    %v334 = vshrl.u32 %v333, 7
    %v335 = vsub.s32 0, %v334
    %v336 = vrot.slane %v331, %v335
    %337 = vrot.lane.b32.xlu0 %v336, 31
    %v338 = vpop.permute.xlu0 %337
    %340 = vst.msk [vmem:[#allocation2 + $0x21] sm:$0x1] %vm231, %v338
    %v341 = vld [vmem:[#allocation3 + $0x1] sm:$0x1]
    %v343 = vlaneseq
    %v344 = vshrl.u32 %v343, 7
    %v345 = vsub.s32 0, %v344
    %v346 = vrot.slane %v341, %v345
    %347 = vrot.lane.b32.xlu0 %v346, 88
    %v348 = vpop.permute.xlu0 %347
    %350 = vst.msk [vmem:[#allocation2 + $0x3b] sm:$0x1] %vm220, %v348
    %v351 = vld [vmem:[#allocation3 + $0x5] sm:$0x1]
    %v353 = vlaneseq
    %v354 = vshrl.u32 %v353, 7
    %v355 = vsub.s32 0, %v354
    %v356 = vrot.slane %v351, %v355
    %357 = vrot.lane.b32.xlu0 %v356, 36
    %v358 = vpop.permute.xlu0 %357
    %360 = vst.msk [vmem:[#allocation2 + $0x3b] sm:$0x1] %vm231, %v358
    %v361 = vld [vmem:[#allocation3 + $0x1] sm:$0x1]
    %v363 = vlaneseq
    %v364 = vshrl.u32 %v363, 7
    %v365 = vsub.s32 0, %v364
    %v366 = vrot.slane %v361, %v365
    %367 = vrot.lane.b32.xlu0 %v366, 52
    %v368 = vpop.permute.xlu0 %367
    %370 = vst.msk [vmem:[#allocation2 + $0x3c] sm:$0x1] %vm220, %v368
    %v371 = vld [vmem:[#allocation3 + $0x5] sm:$0x1]
    %v373 = vlaneseq
    %v374 = vshrl.u32 %v373, 7
    %v375 = vsub.s32 0, %v374
    %v376 = vrot.slane %v371, %v375
    %377 = vrot.lane.b32.xlu0 %v376, 35
    %v378 = vpop.permute.xlu0 %377
    %380 = vst.msk [vmem:[#allocation2 + $0x3c] sm:$0x1] %vm231, %v378
    %v381 = vld [vmem:[#allocation3 + $0x1] sm:$0x5]
    %v383 = vlaneseq
    %v384 = vshrl.u32 %v383, 7
    %v385 = vsub.s32 0, %v384
    %v386 = vrot.slane %v381, %v385
    %v387 = vlaneseq
    %v388 = vshrl.u32 %v387, 7
    %v389 = vsub.s32 2, %v388
    %v390 = vrot.slane %v381, %v389
    %391 = vrot.lane.b32.xlu0 %v386, 16
    %v392 = vpop.permute.xlu0 %391
    %393 = vrot.lane.b32.xlu0 %v390, 16
    %v394 = vpop.permute.xlu0 %393
    %v395 = vsel %vm267, %v392, %v394
    %397 = vst.msk [vmem:[#allocation2 + $0x3d] sm:$0x1] %vm220, %v395
    %v398 = vld [vmem:[#allocation3 + $0x5] sm:$0x1]
    %v400 = vlaneseq
    %v401 = vshrl.u32 %v400, 7
    %v402 = vsub.s32 0, %v401
    %v403 = vrot.slane %v398, %v402
    %404 = vrot.lane.b32.xlu0 %v403, 34
    %v405 = vpop.permute.xlu0 %404
    %407 = vst.msk [vmem:[#allocation2 + $0x3d] sm:$0x1] %vm231, %v405
    %v408 = vld [vmem:[#allocation3 + $0x3] sm:$0x1]
    %v410 = vlaneseq
    %v411 = vshrl.u32 %v410, 7
    %v412 = vsub.s32 0, %v411
    %v413 = vrot.slane %v408, %v412
    %414 = vrot.lane.b32.xlu0 %v413, 108
    %v415 = vpop.permute.xlu0 %414
    %417 = vst.msk [vmem:[#allocation2 + $0x3e] sm:$0x1] %vm220, %v415
    %v418 = vld [vmem:[#allocation3 + $0x5] sm:$0x1]
    %v420 = vlaneseq
    %v421 = vshrl.u32 %v420, 7
    %v422 = vsub.s32 0, %v421
    %v423 = vrot.slane %v418, %v422
    %424 = vrot.lane.b32.xlu0 %v423, 33
    %v425 = vpop.permute.xlu0 %424
    %427 = vst.msk [vmem:[#allocation2 + $0x3e] sm:$0x1] %vm231, %v425
    %v428 = vld [vmem:[#allocation3 + $0x3] sm:$0x1]
    %v430 = vlaneseq
    %v431 = vshrl.u32 %v430, 7
    %v432 = vsub.s32 0, %v431
    %v433 = vrot.slane %v428, %v432
    %434 = vrot.lane.b32.xlu0 %v433, 72
    %v435 = vpop.permute.xlu0 %434
    %437 = vst.msk [vmem:[#allocation2 + $0x3f] sm:$0x1] %vm220, %v435
    %v438 = vld [vmem:[#allocation3 + $0x5] sm:$0x1]
    %v440 = vlaneseq
    %v441 = vshrl.u32 %v440, 7
    %v442 = vsub.s32 0, %v441
    %v443 = vrot.slane %v438, %v442
    %444 = vrot.lane.b32.xlu0 %v443, 32
    %v445 = vpop.permute.xlu0 %444
    %447 = vst.msk [vmem:[#allocation2 + $0x3f] sm:$0x1] %vm231, %v445
    %v448 = vld [vmem:[#allocation3 + $0x3] sm:$0x1]
    %v450 = vlaneseq
    %v451 = vshrl.u32 %v450, 7
    %v452 = vsub.s32 0, %v451
    %v453 = vrot.slane %v448, %v452
    %454 = vrot.lane.b32.xlu0 %v453, 36
    %v455 = vpop.permute.xlu0 %454
    %457 = vst.msk [vmem:[#allocation2 + $0x50] sm:$0x1] %vm220, %v455
    %v458 = vld [vmem:[#allocation3 + $0x5] sm:$0x1]
    %v460 = vlaneseq
    %v461 = vshrl.u32 %v460, 7
    %v462 = vsub.s32 0, %v461
    %v463 = vrot.slane %v458, %v462
    %464 = vrot.lane.b32.xlu0 %v463, 31
    %v465 = vpop.permute.xlu0 %464
    %467 = vst.msk [vmem:[#allocation2 + $0x50] sm:$0x1] %vm231, %v465
    %v468 = vld [vmem:[#allocation3 + $0x4] sm:$0x1]
    %v470 = vlaneseq
    %v471 = vshrl.u32 %v470, 7
    %v472 = vsub.s32 0, %v471
    %v473 = vrot.slane %v468, %v472
    %474 = vrot.lane.b32.xlu0 %v473, 122
    %v475 = vpop.permute.xlu0 %474
    %vm477 = vcmask 778240
    %478 = vst.msk [vmem:[#allocation2 + $0x2a] sm:$0x1] %vm477, %v475
    %v479 = vld [vmem:[#allocation3 + $0xa] sm:$0x1]
    %v481 = vlaneseq
    %v482 = vshrl.u32 %v481, 7
    %v483 = vsub.s32 0, %v482
    %v484 = vrot.slane %v479, %v483
    %485 = vrot.lane.b32.xlu0 %v484, 122
    %v486 = vpop.permute.xlu0 %485
    %vm488 = vcmask 787200
    %489 = vst.msk [vmem:[#allocation2 + $0x2a] sm:$0x1] %vm488, %v486
    %v490 = vld [vmem:[#allocation3 + $0x4] sm:$0x5]
    %v492 = vlaneseq
    %v493 = vshrl.u32 %v492, 7
    %v494 = vsub.s32 0, %v493
    %v495 = vrot.slane %v490, %v494
    %v496 = vlaneseq
    %v497 = vshrl.u32 %v496, 7
    %v498 = vsub.s32 2, %v497
    %v499 = vrot.slane %v490, %v498
    %500 = vrot.lane.b32.xlu0 %v495, 26
    %v501 = vpop.permute.xlu0 %500
    %502 = vrot.lane.b32.xlu0 %v499, 26
    %v503 = vpop.permute.xlu0 %502
    %vm504 = vcmask 211968
    %v505 = vsel %vm504, %v501, %v503
    %507 = vst.msk [vmem:[#allocation2 + $0x2b] sm:$0x1] %vm477, %v505
    %v508 = vld [vmem:[#allocation3 + $0xa] sm:$0x1]
    %v510 = vlaneseq
    %v511 = vshrl.u32 %v510, 7
    %v512 = vsub.s32 0, %v511
    %v513 = vrot.slane %v508, %v512
    %514 = vrot.lane.b32.xlu0 %v513, 121
    %v515 = vpop.permute.xlu0 %514
    %517 = vst.msk [vmem:[#allocation2 + $0x2b] sm:$0x1] %vm488, %v515
    %v518 = vld [vmem:[#allocation3 + $0x6] sm:$0x5]
    %v520 = vlaneseq
    %v521 = vshrl.u32 %v520, 7
    %v522 = vsub.s32 0, %v521
    %v523 = vrot.slane %v518, %v522
    %v524 = vlaneseq
    %v525 = vshrl.u32 %v524, 7
    %v526 = vsub.s32 2, %v525
    %v527 = vrot.slane %v518, %v526
    %528 = vrot.lane.b32.xlu0 %v523, 58
    %v529 = vpop.permute.xlu0 %528
    %530 = vrot.lane.b32.xlu0 %v527, 58
    %v531 = vpop.permute.xlu0 %530
    %vm532 = vcmask 474112
    %v533 = vsel %vm532, %v529, %v531
    %535 = vst.msk [vmem:[#allocation2 + $0x2c] sm:$0x1] %vm477, %v533
    %v536 = vld [vmem:[#allocation3 + $0xa] sm:$0x1]
    %v538 = vlaneseq
    %v539 = vshrl.u32 %v538, 7
    %v540 = vsub.s32 0, %v539
    %v541 = vrot.slane %v536, %v540
    %542 = vrot.lane.b32.xlu0 %v541, 120
    %v543 = vpop.permute.xlu0 %542
    %545 = vst.msk [vmem:[#allocation2 + $0x2c] sm:$0x1] %vm488, %v543
    %v546 = vld [vmem:[#allocation3 + $0x8] sm:$0x5]
    %v548 = vlaneseq
    %v549 = vshrl.u32 %v548, 7
    %v550 = vsub.s32 0, %v549
    %v551 = vrot.slane %v546, %v550
    %v552 = vlaneseq
    %v553 = vshrl.u32 %v552, 7
    %v554 = vsub.s32 2, %v553
    %v555 = vrot.slane %v546, %v554
    %556 = vrot.lane.b32.xlu0 %v551, 90
    %v557 = vpop.permute.xlu0 %556
    %558 = vrot.lane.b32.xlu0 %v555, 90
    %v559 = vpop.permute.xlu0 %558
    %vm560 = vcmask 736256
    %v561 = vsel %vm560, %v557, %v559
    %563 = vst.msk [vmem:[#allocation2 + $0x2d] sm:$0x1] %vm477, %v561
    %v564 = vld [vmem:[#allocation3 + $0xa] sm:$0x1]
    %v566 = vlaneseq
    %v567 = vshrl.u32 %v566, 7
    %v568 = vsub.s32 0, %v567
    %v569 = vrot.slane %v564, %v568
    %570 = vrot.lane.b32.xlu0 %v569, 119
    %v571 = vpop.permute.xlu0 %570
    %573 = vst.msk [vmem:[#allocation2 + $0x2d] sm:$0x1] %vm488, %v571
    %v574 = vld [vmem:[#allocation3 + $0xa] sm:$0x1]
    %v576 = vlaneseq
    %v577 = vshrl.u32 %v576, 7
    %v578 = vsub.s32 0, %v577
    %v579 = vrot.slane %v574, %v578
    %580 = vrot.lane.b32.xlu0 %v579, 122
    %v581 = vpop.permute.xlu0 %580
    %583 = vst.msk [vmem:[#allocation2 + $0x2e] sm:$0x1] %vm477, %v581
    %v584 = vld [vmem:[#allocation3 + $0xa] sm:$0x1]
    %v586 = vlaneseq
    %v587 = vshrl.u32 %v586, 7
    %v588 = vsub.s32 0, %v587
    %v589 = vrot.slane %v584, %v588
    %590 = vrot.lane.b32.xlu0 %v589, 118
    %v591 = vpop.permute.xlu0 %590
    %593 = vst.msk [vmem:[#allocation2 + $0x2e] sm:$0x1] %vm488, %v591
    %v594 = vld [vmem:[#allocation3 + $0x5] sm:$0x1]
    %v596 = vlaneseq
    %v597 = vshrl.u32 %v596, 7
    %v598 = vsub.s32 0, %v597
    %v599 = vrot.slane %v594, %v598
    %600 = vrot.lane.b32.xlu0 %v599, 122
    %v601 = vpop.permute.xlu0 %600
    %603 = vst.msk [vmem:[#allocation2 + $0x59] sm:$0x1] %vm477, %v601
    %v604 = vld [vmem:[#allocation3 + $0xb] sm:$0x1]
    %v606 = vlaneseq
    %v607 = vshrl.u32 %v606, 7
    %v608 = vsub.s32 0, %v607
    %v609 = vrot.slane %v604, %v608
    %610 = vrot.lane.b32.xlu0 %v609, 122
    %v611 = vpop.permute.xlu0 %610
    %613 = vst.msk [vmem:[#allocation2 + $0x59] sm:$0x1] %vm488, %v611
    %v614 = vld [vmem:[#allocation3 + $0x5] sm:$0x5]
    %v616 = vlaneseq
    %v617 = vshrl.u32 %v616, 7
    %v618 = vsub.s32 0, %v617
    %v619 = vrot.slane %v614, %v618
    %v620 = vlaneseq
    %v621 = vshrl.u32 %v620, 7
    %v622 = vsub.s32 2, %v621
    %v623 = vrot.slane %v614, %v622
    %624 = vrot.lane.b32.xlu0 %v619, 26
    %v625 = vpop.permute.xlu0 %624
    %626 = vrot.lane.b32.xlu0 %v623, 26
    %v627 = vpop.permute.xlu0 %626
    %v628 = vsel %vm504, %v625, %v627
    %630 = vst.msk [vmem:[#allocation2 + $0x5a] sm:$0x1] %vm477, %v628
    %v631 = vld [vmem:[#allocation3 + $0xb] sm:$0x1]
    %v633 = vlaneseq
    %v634 = vshrl.u32 %v633, 7
    %v635 = vsub.s32 0, %v634
    %v636 = vrot.slane %v631, %v635
    %637 = vrot.lane.b32.xlu0 %v636, 121
    %v638 = vpop.permute.xlu0 %637
    %640 = vst.msk [vmem:[#allocation2 + $0x5a] sm:$0x1] %vm488, %v638
    %v641 = vld [vmem:[#allocation3 + $0x7] sm:$0x5]
    %v643 = vlaneseq
    %v644 = vshrl.u32 %v643, 7
    %v645 = vsub.s32 0, %v644
    %v646 = vrot.slane %v641, %v645
    %v647 = vlaneseq
    %v648 = vshrl.u32 %v647, 7
    %v649 = vsub.s32 2, %v648
    %v650 = vrot.slane %v641, %v649
    %651 = vrot.lane.b32.xlu0 %v646, 58
    %v652 = vpop.permute.xlu0 %651
    %653 = vrot.lane.b32.xlu0 %v650, 58
    %v654 = vpop.permute.xlu0 %653
    %v655 = vsel %vm532, %v652, %v654
    %657 = vst.msk [vmem:[#allocation2 + $0x5b] sm:$0x1] %vm477, %v655
    %v658 = vld [vmem:[#allocation3 + $0xb] sm:$0x1]
    %v660 = vlaneseq
    %v661 = vshrl.u32 %v660, 7
    %v662 = vsub.s32 0, %v661
    %v663 = vrot.slane %v658, %v662
    %664 = vrot.lane.b32.xlu0 %v663, 120
    %v665 = vpop.permute.xlu0 %664
    %667 = vst.msk [vmem:[#allocation2 + $0x5b] sm:$0x1] %vm488, %v665
    %v668 = vld [vmem:[#allocation3 + $0x9] sm:$0x5]
    %v670 = vlaneseq
    %v671 = vshrl.u32 %v670, 7
    %v672 = vsub.s32 0, %v671
    %v673 = vrot.slane %v668, %v672
    %v674 = vlaneseq
    %v675 = vshrl.u32 %v674, 7
    %v676 = vsub.s32 2, %v675
    %v677 = vrot.slane %v668, %v676
    %678 = vrot.lane.b32.xlu0 %v673, 90
    %v679 = vpop.permute.xlu0 %678
    %680 = vrot.lane.b32.xlu0 %v677, 90
    %v681 = vpop.permute.xlu0 %680
    %v682 = vsel %vm560, %v679, %v681
    %684 = vst.msk [vmem:[#allocation2 + $0x5c] sm:$0x1] %vm477, %v682
    %v685 = vld [vmem:[#allocation3 + $0xb] sm:$0x1]
    %v687 = vlaneseq
    %v688 = vshrl.u32 %v687, 7
    %v689 = vsub.s32 0, %v688
    %v690 = vrot.slane %v685, %v689
    %691 = vrot.lane.b32.xlu0 %v690, 119
    %v692 = vpop.permute.xlu0 %691
    %694 = vst.msk [vmem:[#allocation2 + $0x5c] sm:$0x1] %vm488, %v692
    %v695 = vld [vmem:[#allocation3 + $0xb] sm:$0x1]
    %v697 = vlaneseq
    %v698 = vshrl.u32 %v697, 7
    %v699 = vsub.s32 0, %v698
    %v700 = vrot.slane %v695, %v699
    %701 = vrot.lane.b32.xlu0 %v700, 122
    %v702 = vpop.permute.xlu0 %701
    %704 = vst.msk [vmem:[#allocation2 + $0x5d] sm:$0x1] %vm477, %v702
    %v705 = vld [vmem:[#allocation3 + $0xb] sm:$0x1]
    %v707 = vlaneseq
    %v708 = vshrl.u32 %v707, 7
    %v709 = vsub.s32 0, %v708
    %v710 = vrot.slane %v705, %v709
    %711 = vrot.lane.b32.xlu0 %v710, 118
    %v712 = vpop.permute.xlu0 %711
    %714 = vst.msk [vmem:[#allocation2 + $0x5d] sm:$0x1] %vm488, %v712
    %v715 = vld [vmem:[#allocation2] sm:$0xff]
    %v716 = vld [vmem:[#allocation2 + $0x8] sm:$0xff]
    %v717 = vld [vmem:[#allocation2 + $0x10] sm:$0xff]
    %v718 = vld [vmem:[#allocation2 + $0x18] sm:$0xff]
    %v719 = vld [vmem:[#allocation2 + $0x20] sm:$0xff]
    %v720 = vld [vmem:[#allocation2 + $0x28] sm:$0xff]
    %v721 = vld [vmem:[#allocation2 + $0x30] sm:$0xff]
    %v722 = vld [vmem:[#allocation2 + $0x38] sm:$0xff]
    %v723 = vld [vmem:[#allocation2 + $0x40] sm:$0xff]
    %v724 = vld [vmem:[#allocation2 + $0x48] sm:$0xff]
    %v725 = vld [vmem:[#allocation2 + $0x50] sm:$0xff]
    %v726 = vld [vmem:[#allocation2 + $0x58] sm:$0xff]
    %v727 = vld [vmem:[#allocation5] sm:$0xff]
    %v728 = vld [vmem:[#allocation5 + $0x8] sm:$0xff]
    %v729 = vld [vmem:[#allocation5 + $0x10] sm:$0xff]
    %v730 = vld [vmem:[#allocation5 + $0x18] sm:$0xff]
    %v731 = vld [vmem:[#allocation5 + $0x20] sm:$0xff]
    %v732 = vld [vmem:[#allocation5 + $0x28] sm:$0xff]
    %v733 = vld [vmem:[#allocation5 + $0x30] sm:$0xff]
    %v734 = vld [vmem:[#allocation5 + $0x38] sm:$0xff]
    %v735 = vld [vmem:[#allocation5 + $0x40] sm:$0xff]
    %v736 = vld [vmem:[#allocation5 + $0x48] sm:$0xff]
    %v737 = vld [vmem:[#allocation5 + $0x50] sm:$0xff]
    %v738 = vld [vmem:[#allocation5 + $0x58] sm:$0xff]
    %v739 = vld [vmem:[#allocation5 + $0x60] sm:$0xff]
    %v740 = vld [vmem:[#allocation5 + $0x68] sm:$0xff]
    %v741 = vld [vmem:[#allocation5 + $0x70] sm:$0xff]
    %v742 = vld [vmem:[#allocation5 + $0x78] sm:$0xff]
    %v743 = vld [vmem:[#allocation5 + $0x80] sm:$0xff]
    %v744 = vld [vmem:[#allocation5 + $0x88] sm:$0xff]
    %v745 = vld [vmem:[#allocation5 + $0x90] sm:$0xff]
    %v746 = vld [vmem:[#allocation5 + $0x98] sm:$0xff]
    %v747 = vld [vmem:[#allocation5 + $0xa0] sm:$0xff]
    %v748 = vld [vmem:[#allocation5 + $0xa8] sm:$0xff]
    %v749 = vld [vmem:[#allocation5 + $0xb0] sm:$0xff]
    %v750 = vld [vmem:[#allocation5 + $0xb8] sm:$0xff]
    %v751 = vld [vmem:[#allocation5 + $0xc0] sm:$0xff]
    %v752 = vld [vmem:[#allocation5 + $0xc8] sm:$0xff]
    %v753 = vld [vmem:[#allocation5 + $0xd0] sm:$0xff]
    %v754 = vld [vmem:[#allocation5 + $0xd8] sm:$0xff]
    %v755 = vld [vmem:[#allocation5 + $0xe0] sm:$0xff]
    %v756 = vld [vmem:[#allocation5 + $0xe8] sm:$0xff]
    %v757 = vld [vmem:[#allocation5 + $0xf0] sm:$0xff]
    %v758 = vld [vmem:[#allocation5 + $0xf8] sm:$0xff]
    %v759 = vld [vmem:[#allocation5 + $0x100] sm:$0xff]
    %v760 = vld [vmem:[#allocation5 + $0x108] sm:$0xff]
    %v761 = vld [vmem:[#allocation5 + $0x110] sm:$0xff]
    %v762 = vld [vmem:[#allocation5 + $0x118] sm:$0xff]
    %v763 = vld [vmem:[#allocation5 + $0x120] sm:$0xff]
    %v764 = vld [vmem:[#allocation5 + $0x128] sm:$0xff]
    %v765 = vld [vmem:[#allocation5 + $0x130] sm:$0xff]
    %v766 = vld [vmem:[#allocation5 + $0x138] sm:$0xff]
    %v767 = vld [vmem:[#allocation5 + $0x140] sm:$0xff]
    %v768 = vld [vmem:[#allocation5 + $0x148] sm:$0xff]
    %v769 = vld [vmem:[#allocation5 + $0x150] sm:$0xff]
    %v770 = vld [vmem:[#allocation5 + $0x158] sm:$0xff]
    %v771 = vld [vmem:[#allocation5 + $0x160] sm:$0xff]
    %v772 = vld [vmem:[#allocation5 + $0x168] sm:$0xff]
    %v773 = vld [vmem:[#allocation5 + $0x170] sm:$0xff]
    %v774 = vld [vmem:[#allocation5 + $0x178] sm:$0xff]
    %v775 = vld [vmem:[#allocation7] sm:$0xff]
    %v776 = vld [vmem:[#allocation7 + $0x8] sm:$0xff]
    %v777 = vld [vmem:[#allocation7 + $0x10] sm:$0xff]
    %v778 = vld [vmem:[#allocation7 + $0x18] sm:$0xff]
    %779 = vmatprep.subr.mxu0 0.0
    %780 = vmatpush1.msra.mxu0 %v727
    %781 = vmatprep.subr.mxu0 0.0
    %782 = vmatpush1.msra.mxu0 %v728
    %783 = vmatprep.subr.mxu0 0.0
    %784 = vmatpush1.msra.mxu0 %v729
    %785 = vmatprep.subr.mxu0 0.0
    %786 = vmatpush1.msra.mxu0 %v730
    %787 = vmatprep.subr.mxu0 0.0
    %788 = vmatpush1.msra.mxu0 %v731
    %789 = vmatprep.subr.mxu0 0.0
    %790 = vmatpush1.msra.mxu0 %v732
    %791 = vmatprep.subr.mxu0 0.0
    %792 = vmatpush1.msra.mxu0 %v733
    %793 = vmatprep.subr.mxu0 0.0
    %794 = vmatpush1.msra.mxu0 %v734
    %795 = vmatprep.subr.mxu0 0.0
    %796 = vmatpush1.msra.mxu0 %v735
    %797 = vmatprep.subr.mxu0 0.0
    %798 = vmatpush1.msra.mxu0 %v736
    %799 = vmatprep.subr.mxu0 0.0
    %800 = vmatpush1.msra.mxu0 %v737
    %801 = vmatprep.subr.mxu0 0.0
    %802 = vmatpush1.msra.mxu0 %v738
    %803 = vmatprep.subr.mxu0 0.0
    %804 = vmatpush1.msra.mxu0 %v739
    %805 = vmatprep.subr.mxu0 0.0
    %806 = vmatpush1.msra.mxu0 %v740
    %807 = vmatprep.subr.mxu0 0.0
    %808 = vmatpush1.msra.mxu0 %v741
    %809 = vmatprep.subr.mxu0 0.0
    %810 = vmatpush1.msra.mxu0 %v742
    %811 = vmatprep.subr.mxu0 0.0
    %812 = vmatpush1.msra.mxu0 %v743
    %813 = vmatprep.subr.mxu0 0.0
    %814 = vmatpush1.msra.mxu0 %v744
    %815 = vmatprep.subr.mxu0 0.0
    %816 = vmatpush1.msra.mxu0 %v745
    %817 = vmatprep.subr.mxu0 0.0
    %818 = vmatpush1.msra.mxu0 %v746
    %819 = vmatprep.subr.mxu0 0.0
    %820 = vmatpush1.msra.mxu0 %v747
    %821 = vmatprep.subr.mxu0 0.0
    %822 = vmatpush1.msra.mxu0 %v748
    %823 = vmatprep.subr.mxu0 0.0
    %824 = vmatpush1.msra.mxu0 %v749
    %825 = vmatprep.subr.mxu0 0.0
    %826 = vmatpush1.msra.mxu0 %v750
    %827 = vmatprep.subr.mxu0 0.0
    %828 = vmatpush1.msra.mxu0 %v751
    %829 = vmatprep.subr.mxu0 0.0
    %830 = vmatpush1.msra.mxu0 %v752
    %831 = vmatprep.subr.mxu0 0.0
    %832 = vmatpush1.msra.mxu0 %v753
    %833 = vmatprep.subr.mxu0 0.0
    %834 = vmatpush1.msra.mxu0 %v754
    %835 = vmatprep.subr.mxu0 0.0
    %836 = vmatpush1.msra.mxu0 %v755
    %837 = vmatprep.subr.mxu0 0.0
    %838 = vmatpush1.msra.mxu0 %v756
    %839 = vmatprep.subr.mxu0 0.0
    %840 = vmatpush1.msra.mxu0 %v757
    %841 = vmatprep.subr.mxu0 0.0
    %842 = vmatpush1.msra.mxu0 %v758
    %843 = vmatprep.mubr.f32.mxu0 %v716
    %844 = vmatmul.mubr.f32.gmra.mrb[0].mxu0 %v715
    %v845 = vpop.f32.mrb[0].mxu0
    %v846 = vadd.f32 %v775, %v845
    %v847 = vpop.f32.mrb[0].mxu0
    %848 = vmatprep.mubr.f32.mxu0 %v719
    %849 = vmatmul.mubr.f32.gmra.mrb[0].mxu0 %v718
    %v850 = vpop.f32.mrb[0].mxu0
    %v851 = vadd.f32 %v776, %v850
    %v852 = vpop.f32.mrb[0].mxu0
    %853 = vmatprep.mubr.f32.mxu0 %v722
    %854 = vmatmul.mubr.f32.gmra.mrb[0].mxu0 %v721
    %v855 = vpop.f32.mrb[0].mxu0
    %v856 = vadd.f32 %v777, %v855
    %v857 = vpop.f32.mrb[0].mxu0
    %858 = vmatprep.mubr.f32.mxu0 %v725
    %859 = vmatmul.mubr.f32.gmra.mrb[0].mxu0 %v724
    %v860 = vpop.f32.mrb[0].mxu0
    %v861 = vadd.f32 %v778, %v860
    %v862 = vpop.f32.mrb[0].mxu0
    %863 = vdwg.mxu0
    %864 = vmatprep.subr.mxu0 0.0
    %865 = vmatpush1.msra.mxu0 %v759
    %866 = vmatprep.subr.mxu0 0.0
    %867 = vmatpush1.msra.mxu0 %v760
    %868 = vmatprep.subr.mxu0 0.0
    %869 = vmatpush1.msra.mxu0 %v761
    %870 = vmatprep.subr.mxu0 0.0
    %871 = vmatpush1.msra.mxu0 %v762
    %872 = vmatprep.subr.mxu0 0.0
    %873 = vmatpush1.msra.mxu0 %v763
    %874 = vmatprep.subr.mxu0 0.0
    %875 = vmatpush1.msra.mxu0 %v764
    %876 = vmatprep.subr.mxu0 0.0
    %877 = vmatpush1.msra.mxu0 %v765
    %878 = vmatprep.subr.mxu0 0.0
    %879 = vmatpush1.msra.mxu0 %v766
    %880 = vmatprep.subr.mxu0 0.0
    %881 = vmatpush1.msra.mxu0 %v767
    %882 = vmatprep.subr.mxu0 0.0
    %883 = vmatpush1.msra.mxu0 %v768
    %884 = vmatprep.subr.mxu0 0.0
    %885 = vmatpush1.msra.mxu0 %v769
    %886 = vmatprep.subr.mxu0 0.0
    %887 = vmatpush1.msra.mxu0 %v770
    %888 = vmatprep.subr.mxu0 0.0
    %889 = vmatpush1.msra.mxu0 %v771
    %890 = vmatprep.subr.mxu0 0.0
    %891 = vmatpush1.msra.mxu0 %v772
    %892 = vmatprep.subr.mxu0 0.0
    %893 = vmatpush1.msra.mxu0 %v773
    %894 = vmatprep.subr.mxu0 0.0
    %895 = vmatpush1.msra.mxu0 %v774
    %896 = vmatprep.subr.mxu0 0.0
    %897 = vmatpush1.msra.mxu0 0.0
    %898 = vmatprep.subr.mxu0 0.0
    %899 = vmatpush1.msra.mxu0 0.0
    %900 = vmatprep.subr.mxu0 0.0
    %901 = vmatpush1.msra.mxu0 0.0
    %902 = vmatprep.subr.mxu0 0.0
    %903 = vmatpush1.msra.mxu0 0.0
    %904 = vmatprep.subr.mxu0 0.0
    %905 = vmatpush1.msra.mxu0 0.0
    %906 = vmatprep.subr.mxu0 0.0
    %907 = vmatpush1.msra.mxu0 0.0
    %908 = vmatprep.subr.mxu0 0.0
    %909 = vmatpush1.msra.mxu0 0.0
    %910 = vmatprep.subr.mxu0 0.0
    %911 = vmatpush1.msra.mxu0 0.0
    %912 = vmatprep.subr.mxu0 0.0
    %913 = vmatpush1.msra.mxu0 0.0
    %914 = vmatprep.subr.mxu0 0.0
    %915 = vmatpush1.msra.mxu0 0.0
    %916 = vmatprep.subr.mxu0 0.0
    %917 = vmatpush1.msra.mxu0 0.0
    %918 = vmatprep.subr.mxu0 0.0
    %919 = vmatpush1.msra.mxu0 0.0
    %920 = vmatprep.subr.mxu0 0.0
    %921 = vmatpush1.msra.mxu0 0.0
    %922 = vmatprep.subr.mxu0 0.0
    %923 = vmatpush1.msra.mxu0 0.0
    %924 = vmatprep.subr.mxu0 0.0
    %925 = vmatpush1.msra.mxu0 0.0
    %926 = vmatprep.subr.mxu0 0.0
    %927 = vmatpush1.msra.mxu0 0.0
    %928 = vmatprep.mubr.f32.mxu0 0.0
    %929 = vmatmul.mubr.f32.gmra.mrb[0].mxu0 %v717
    %v930 = vpop.f32.mrb[0].mxu0
    %v931 = vadd.f32 %v846, %v930
    %v932 = vpop.f32.mrb[0].mxu0
    %933 = vmatprep.mubr.f32.mxu0 0.0
    %934 = vmatmul.mubr.f32.gmra.mrb[0].mxu0 %v720
    %v935 = vpop.f32.mrb[0].mxu0
    %v936 = vadd.f32 %v851, %v935
    %v937 = vpop.f32.mrb[0].mxu0
    %938 = vmatprep.mubr.f32.mxu0 0.0
    %939 = vmatmul.mubr.f32.gmra.mrb[0].mxu0 %v723
    %v940 = vpop.f32.mrb[0].mxu0
    %v941 = vadd.f32 %v856, %v940
    %v942 = vpop.f32.mrb[0].mxu0
    %943 = vmatprep.mubr.f32.mxu0 0.0
    %944 = vmatmul.mubr.f32.gmra.mrb[0].mxu0 %v726
    %v945 = vpop.f32.mrb[0].mxu0
    %v946 = vadd.f32 %v861, %v945
    %v947 = vpop.f32.mrb[0].mxu0
    %948 = vdwg.mxu0
    %949 = vst [vmem:[%s3] sm:$0xff] %v931
    %950 = vst [vmem:[%s3 + $0x8] sm:$0xff] %v936
    %951 = vst [vmem:[%s3 + $0x10] sm:$0xff] %v941
    %952 = vst [vmem:[%s3 + $0x18] sm:$0xff] %v946
    // Predicated region
    $region26: #{embedder_neuron_group_index_forward.1} parent=1 // pred_check
      _
    $region27: #{embedder_neuron_group_index_forward.1} parent=1 // pred_check_branch
      %954 = sbr.rel (0) target = $region29
    $region28: #{embedder_neuron_group_index_forward.1} parent=1 // pred_region
      _
    $region29: #{embedder_neuron_group_index_forward.1} parent=1 // pred_fallthru
      _
    // Predicated region
    $region30: #{embedder_neuron_group_index_forward.1} parent=1 // pred_check
      _
    $region31: #{embedder_neuron_group_index_forward.1} parent=1 // pred_check_branch
      %956 = sbr.rel (0) target = $region33
    $region32: #{embedder_neuron_group_index_forward.1} parent=1 // pred_region
      _
    $region33: #{embedder_neuron_group_index_forward.1} parent=1 // pred_fallthru
      _
    %957 = vsyncpa [#allocation4], 1
    %958 = vsyncpa [#allocation6], 1

</llo_original>
